<compile_context>
chip_gen: v7x
topology: tpu7x:2x2x1
jax: 0.10.0
libtpu: 0.0.40
codegen_flags: <defaults>
</compile_context>

<pallas_src>
import functools
import math

import jax
import jax.numpy as jnp
from jax.experimental import pallas as pl
from jax.experimental.pallas import tpu as pltpu


_GELU_C = math.sqrt(2.0 / math.pi)
_VMEM_LIMIT = 48 * 1024 * 1024      # explicit scoped-VMEM cap (fits v7x's 64 MiB)
_VMEM_BUDGET = 40 * 1024 * 1024     # tile-selection budget (leave headroom)


def _gelu(x):
    # TODO(synk): nn.GELU() defaults to the exact erf form; the tanh
    # approximation is used (guaranteed EUP lowering, ~1e-3 max deviation).
    return 0.5 * x * (1.0 + jnp.tanh(_GELU_C * (x + 0.044715 * (x * x * x))))


def _round_up(x, m):
    return (x + m - 1) // m * m


# ----------------------------- 1x1 conv + GELU ------------------------------

def _conv1x1_kernel(x_ref, w_ref, b_ref, o_ref):
    # x_ref: (Cin, TP) f32   w_ref: (Cout, Cin) bf16   b_ref: (Cout, 1) f32
    x = x_ref[...].astype(jnp.bfloat16)
    h = jnp.dot(w_ref[...], x, preferred_element_type=jnp.float32)
    o_ref[...] = _gelu(h + b_ref[...]).astype(o_ref.dtype)


def conv1x1_gelu(x, w, b, *, out_dtype=jnp.bfloat16, max_tp=2048):
    """x: (N, Cin, H, W); w: (Cout, Cin); b: (Cout,). Returns (N, Cout, H, W)."""
    # TODO(synk): fuse this channel matmul into the first deconv kernel to
    # remove the intermediate HBM round-trip entirely.
    N, Cin, H, W = x.shape
    Cout = w.shape[0]
    HW = H * W
    x2 = x.reshape(N, Cin, HW)                 # free reshape, NCHW-native
    tp = HW if HW <= max_tp else max_tp        # lane-dense pixel tile (128-mult)
    grid = (N, pl.cdiv(HW, tp))

    out = pl.pallas_call(
        _conv1x1_kernel,
        out_shape=jax.ShapeDtypeStruct((N, Cout, HW), out_dtype),
        grid_spec=pltpu.PrefetchScalarGridSpec(
            num_scalar_prefetch=0,
            grid=grid,
            in_specs=[
                pl.BlockSpec((None, Cin, tp), lambda n, j: (n, 0, j)),
                pl.BlockSpec((Cout, Cin), lambda n, j: (0, 0)),
                pl.BlockSpec((Cout, 1), lambda n, j: (0, 0)),
            ],
            out_specs=pl.BlockSpec((None, Cout, tp), lambda n, j: (n, 0, j)),
        ),
        compiler_params=pltpu.CompilerParams(
            dimension_semantics=("parallel", "parallel"),
            vmem_limit_bytes=_VMEM_LIMIT),
    )(x2, w.astype(jnp.bfloat16), b.reshape(Cout, 1).astype(jnp.float32))
    return out.reshape(N, Cout, H, W)


# ---------------- ConvTranspose2d(k=4, s=2, p=1) + bias + GELU ---------------
#
# Output row 2M+a reads padded input row M+dy with kernel row ky = _DY2KY[a][dy]
# (identically for columns).  Padding: 1 top, 2 bottom, 1 left, >=1 right.
_DY2KY = ({0: 3, 1: 1}, {1: 2, 2: 0})


def _deconv_kernel(xm_ref, xh_ref, w_ref, b_ref, o_ref, rhs_ref, *, wp, tmw, cinp):
    # xm_ref: (Cinp, TM*Wp)  xh_ref: (Cinp, 3*Wp)  -> window (Cinp, (TM+3)*Wp)
    # w_ref: (4*Cout, 9*Cinp) bf16   b_ref: (4*Cout, 1) f32
    # o_ref: (4*Cout, TM*Wp)         rhs_ref: (9*Cinp, TM*Wp) bf16 scratch
    win = jnp.concatenate([xm_ref[...], xh_ref[...]], axis=-1)
    # Stage the 9 unique (dy, dx) shifted views once as a K-stacked RHS.
    for q in range(9):
        dy, dx = q // 3, q % 3
        s = dy * wp + dx
        rhs_ref[q * cinp:(q + 1) * cinp, :] = win[:, s:s + tmw]
    # Single MXU matmul: all 4 parities (output sublane-dense), K = 9*Cin_pad.
    acc = jnp.dot(w_ref[...], rhs_ref[...], preferred_element_type=jnp.float32)
    bias = b_ref[...]                           # hoisted broadcast
    o_ref[...] = _gelu(acc + bias).astype(o_ref.dtype)


def _pick_tile(H, W, cinp, cout, in_bytes, out_bytes):
    """Largest row-tile TM (divisor of H) whose VMEM footprint fits the budget."""
    cands = [d for d in (32, 24, 16, 8, 4) if H % d == 0 and H // d >= 2]
    if not cands:
        cands = [H]
    tm, wp = None, None
    for cand in cands:                          # descending tile size
        wq = 128 // math.gcd(cand, 128)
        cwp = _round_up(W + 2, wq)              # TM*Wp is a multiple of 128
        tmw = cand * cwp
        est = (2 * cinp * (cand + 3) * cwp * in_bytes   # main+halo, double-buffered
               + 2 * 4 * cout * tmw * out_bytes          # output, double-buffered
               + 9 * cinp * tmw * in_bytes               # K-stacked RHS scratch
               + 4 * cout * tmw * 4                      # f32 accumulator
               + 4 * cout * 9 * cinp * 2)                # weights
        tm, wp = cand, cwp
        if est <= _VMEM_BUDGET:
            break
    return tm, wp


def deconv4x4_s2_gelu(x, wt, b, *, out_dtype=jnp.bfloat16):
    """x: (N, Cin, H, W); wt: (Cin, Cout, 4, 4) torch layout; b: (Cout,).
    Returns (N, Cout, 2H, 2W)."""
    N, Cin, H, W = x.shape
    Cout = wt.shape[1]
    cinp = _round_up(Cin, 8)                    # sublane-aligned channel pad
    out_b = jnp.dtype(out_dtype).itemsize
    TM, Wp = _pick_tile(H, W, cinp, Cout, 2, out_b)
    nb = H // TM
    TMW = TM * Wp

    # TODO(synk): fold this zero-pad into the kernel (DMA into a zeroed VMEM
    # scratch) to avoid one full-tensor HBM pass.
    xp = jnp.pad(x.astype(jnp.bfloat16),
                 ((0, 0), (0, cinp - Cin), (1, 2), (1, Wp - W - 1)))
    # Main region: padded rows [0, H) -> non-overlapping TM-row blocks.
    xmain = xp[:, :, :H, :].reshape(N, cinp, H * Wp)
    # 3-row halo per block (rows (j+1)*TM .. (j+1)*TM+2 of the padded image).
    halo = jnp.stack(
        [xp[:, :, (j + 1) * TM:(j + 1) * TM + 3, :] for j in range(nb)],
        axis=1).reshape(N, nb, cinp, 3 * Wp)

    # Parity/tap-stacked weight (4*Cout, 9*cinp): rows p = 2a+c major, then co;
    # cols q = dy*3+dx major, then ci; unused (parity, shift) blocks are zero.
    rows = []
    for a in (0, 1):
        for c in (0, 1):
            blks = []
            for dy in range(3):
                for dx in range(3):
                    if dy in _DY2KY[a] and dx in _DY2KY[c]:
                        blk = jnp.transpose(
                            wt[:, :, _DY2KY[a][dy], _DY2KY[c][dx]])   # (Cout, Cin)
                        blk = jnp.pad(blk, ((0, 0), (0, cinp - Cin)))
                    else:
                        blk = jnp.zeros((Cout, cinp), wt.dtype)
                    blks.append(blk)
            rows.append(jnp.concatenate(blks, axis=1))
    w_all = jnp.concatenate(rows, axis=0).astype(jnp.bfloat16)        # (4Cout, 9cinp)
    b_all = jnp.tile(b.astype(jnp.float32), 4).reshape(4 * Cout, 1)

    kernel = functools.partial(_deconv_kernel, wp=Wp, tmw=TMW, cinp=cinp)
    out = pl.pallas_call(
        kernel,
        out_shape=jax.ShapeDtypeStruct((N, 4 * Cout, H * Wp), out_dtype),
        grid_spec=pltpu.PrefetchScalarGridSpec(
            num_scalar_prefetch=0,
            grid=(N, nb),
            in_specs=[
                pl.BlockSpec((None, cinp, TMW), lambda n, j: (n, 0, j)),
                pl.BlockSpec((None, None, cinp, 3 * Wp), lambda n, j: (n, j, 0, 0)),
                pl.BlockSpec((4 * Cout, 9 * cinp), lambda n, j: (0, 0)),
                pl.BlockSpec((4 * Cout, 1), lambda n, j: (0, 0)),
            ],
            out_specs=pl.BlockSpec((None, 4 * Cout, TMW), lambda n, j: (n, 0, j)),
            scratch_shapes=[pltpu.VMEM((9 * cinp, TMW), jnp.bfloat16)],
        ),
        compiler_params=pltpu.CompilerParams(
            dimension_semantics=("parallel", "parallel"),
            vmem_limit_bytes=_VMEM_LIMIT),
    )(xmain, halo, w_all, b_all)

    # Depth-to-space: interleave the 4 parity planes into (2H, 2W).
    # TODO(synk): consume the parity planes directly in the next transposed
    # conv (or interleave in-kernel) to save this HBM round-trip.
    y = out.reshape(N, 2, 2, Cout, H, Wp)[..., :W]
    y = jnp.transpose(y, (0, 3, 4, 1, 5, 2)).reshape(N, Cout, 2 * H, 2 * W)
    return y


def convs_out(x, w1, b1, w2, b2, w3, b3):
    h = conv1x1_gelu(x, w1, b1, out_dtype=jnp.bfloat16)
    h = deconv4x4_s2_gelu(h, w2, b2, out_dtype=jnp.bfloat16)
    h = deconv4x4_s2_gelu(h, w3, b3, out_dtype=jnp.float32)
    return h


# ---------------------------- pure-JAX reference ----------------------------

def _ref_deconv(x, wt, b):
    k, s, p = 4, 2, 1
    kern = jnp.transpose(jnp.flip(wt, axis=(2, 3)), (1, 0, 2, 3))  # (Cout,Cin,4,4)
    y = jax.lax.conv_general_dilated(
        x, kern, window_strides=(1, 1),
        padding=[(k - 1 - p, k - 1 - p)] * 2,
        lhs_dilation=(s, s), rhs_dilation=(1, 1),
        dimension_numbers=("NCHW", "OIHW", "NCHW"),
        precision=jax.lax.Precision.HIGHEST)
    return _gelu(y + b[None, :, None, None])


def reference_convs_out(x, w1, b1, w2, b2, w3, b3):
    h = jnp.einsum("oc,nchw->nohw", w1, x,
                   precision=jax.lax.Precision.HIGHEST) + b1[None, :, None, None]
    h = _gelu(h)
    h = _ref_deconv(h, w2, b2)
    h = _ref_deconv(h, w3, b3)
    return h


if __name__ == "__main__":
    N, dim, H, W = 2, 24, 16, 16            # dim divisible by 2 and 3
    C1, C2, C3 = dim // 2, dim // 3, 3

    key = jax.random.PRNGKey(0)
    k = jax.random.split(key, 7)
    x = jax.random.normal(k[0], (N, dim, H, W), dtype=jnp.float32)

    # Conv2d(dim, dim//2, 1x1) weights as (Cout, Cin); ConvTranspose2d weights
    # in their native torch layout (Cin, Cout, kH, kW); fan-in-ish scaling.
    w1 = jax.random.normal(k[1], (C1, dim), jnp.float32) / math.sqrt(dim)
    b1 = 0.1 * jax.random.normal(k[2], (C1,), jnp.float32)
    w2 = jax.random.normal(k[3], (C1, C2, 4, 4), jnp.float32) / math.sqrt(C1 * 16)
    b2 = 0.1 * jax.random.normal(k[4], (C2,), jnp.float32)
    w3 = jax.random.normal(k[5], (C2, C3, 4, 4), jnp.float32) / math.sqrt(C2 * 16)
    b3 = 0.1 * jax.random.normal(k[6], (C3,), jnp.float32)

    fwd = jax.jit(convs_out)
    out = jax.block_until_ready(fwd(x, w1, b1, w2, b2, w3, b3))

    ref = reference_convs_out(x, w1, b1, w2, b2, w3, b3)
    assert out.shape == (N, 3, 4 * H, 4 * W), out.shape
    # bf16 dot operands / bf16 inter-layer activations vs. f32 HIGHEST reference
    # -> widened tolerance (per review).
    err = float(jnp.max(jnp.abs(out - ref)))
    assert jnp.allclose(out, ref, atol=5e-2, rtol=5e-2), err
    print("KERNEL_OK")
</pallas_src>

<mosaic_0001>
module attributes {stable_mosaic.version = 11 : i64} {
  func.func @_conv1x1_kernel(%arg0: i32, %arg1: i32, %arg2: memref<1x24x256xf32, #tpu.memory_space<vmem>>, %arg3: memref<12x24xbf16, #tpu.memory_space<vmem>>, %arg4: memref<12x1xf32, #tpu.memory_space<vmem>>, %arg5: memref<1x12x256xbf16, #tpu.memory_space<vmem>>) attributes {dimension_semantics = [#tpu.dimension_semantics<parallel>, #tpu.dimension_semantics<parallel>], iteration_bounds = array<i64: 2, 1>, scalar_prefetch = 0 : i64, scratch_operands = 0 : i64, tpu.core_type = #tpu.core_type<tc>, window_params = [{transform_indices = @transform_0, window_bounds = array<i64: 1, 24, 256>}, {pipeline_mode = #tpu.pipeline_mode<synchronous>, transform_indices = @transform_1, window_bounds = array<i64: 12, 24>}, {pipeline_mode = #tpu.pipeline_mode<synchronous>, transform_indices = @transform_2, window_bounds = array<i64: 12, 1>}, {transform_indices = @transform_3, window_bounds = array<i64: 1, 12, 256>}]} {
    %c0 = arith.constant 0 : index
    %c0_0 = arith.constant 0 : index
    %c0_1 = arith.constant 0 : index
    %0 = vector.load %arg2[%c0, %c0_0, %c0_1] : memref<1x24x256xf32, #tpu.memory_space<vmem>>, vector<1x24x256xf32>
    %1 = vector.shape_cast %0 : vector<1x24x256xf32> to vector<24x256xf32>
    %2 = arith.truncf %1 : vector<24x256xf32> to vector<24x256xbf16>
    %c0_2 = arith.constant 0 : index
    %c0_3 = arith.constant 0 : index
    %3 = vector.load %arg3[%c0_2, %c0_3] : memref<12x24xbf16, #tpu.memory_space<vmem>>, vector<12x24xbf16>
    %cst = arith.constant dense<0.000000e+00> : vector<12x256xf32>
    %4 = tpu.matmul %3, %2, %cst {dimension_numbers = #tpu.dot_dimension_numbers<[1], [0], [0], [1], [0, 0, 1, 1], [], []>} : vector<12x24xbf16>, vector<24x256xbf16>, vector<12x256xf32> -> vector<12x256xf32>
    %c0_4 = arith.constant 0 : index
    %c0_5 = arith.constant 0 : index
    %5 = vector.load %arg4[%c0_4, %c0_5] : memref<12x1xf32, #tpu.memory_space<vmem>>, vector<12x1xf32>
    %6 = vector.broadcast %5 : vector<12x1xf32> to vector<12x256xf32>
    %7 = arith.addf %4, %6 : vector<12x256xf32>
    %cst_6 = arith.constant 5.000000e-01 : f32
    %8 = vector.broadcast %cst_6 : f32 to vector<12x256xf32>
    %9 = arith.mulf %8, %7 : vector<12x256xf32>
    %10 = arith.mulf %7, %7 : vector<12x256xf32>
    %11 = arith.mulf %10, %7 : vector<12x256xf32>
    %cst_7 = arith.constant 4.471500e-02 : f32
    %12 = vector.broadcast %cst_7 : f32 to vector<12x256xf32>
    %13 = arith.mulf %12, %11 : vector<12x256xf32>
    %14 = arith.addf %7, %13 : vector<12x256xf32>
    %cst_8 = arith.constant 0.797884583 : f32
    %15 = vector.broadcast %cst_8 : f32 to vector<12x256xf32>
    %16 = arith.mulf %15, %14 : vector<12x256xf32>
    %17 = math.tanh %16 : vector<12x256xf32>
    %cst_9 = arith.constant 1.000000e+00 : f32
    %18 = vector.broadcast %cst_9 : f32 to vector<12x256xf32>
    %19 = arith.addf %18, %17 : vector<12x256xf32>
    %20 = arith.mulf %9, %19 : vector<12x256xf32>
    %21 = arith.truncf %20 : vector<12x256xf32> to vector<12x256xbf16>
    %c0_10 = arith.constant 0 : index
    %c0_11 = arith.constant 0 : index
    %c0_12 = arith.constant 0 : index
    %22 = vector.load %arg5[%c0_10, %c0_11, %c0_12] : memref<1x12x256xbf16, #tpu.memory_space<vmem>>, vector<1x12x256xbf16>
    %23 = vector.shape_cast %22 : vector<1x12x256xbf16> to vector<12x256xbf16>
    %24 = vector.shape_cast %21 : vector<12x256xbf16> to vector<1x12x256xbf16>
    tpu.vector_store %arg5[%c0_10, %c0_11, %c0_12], %24 {strides = array<i32>} : memref<1x12x256xbf16, #tpu.memory_space<vmem>>, vector<1x12x256xbf16>,
    return
  }
  func.func @transform_0(%arg0: i32, %arg1: i32) -> (i32, i32, i32) {
    %c0_i32 = arith.constant 0 : i32
    %c0_i32_0 = arith.constant 0 : i32
    return %arg0, %c0_i32, %arg1 : i32, i32, i32
  }
  func.func @transform_1(%arg0: i32, %arg1: i32) -> (i32, i32) {
    %c0_i32 = arith.constant 0 : i32
    %c0_i32_0 = arith.constant 0 : i32
    %c0_i32_1 = arith.constant 0 : i32
    return %c0_i32, %c0_i32_0 : i32, i32
  }
  func.func @transform_2(%arg0: i32, %arg1: i32) -> (i32, i32) {
    %c0_i32 = arith.constant 0 : i32
    %c0_i32_0 = arith.constant 0 : i32
    %c0_i32_1 = arith.constant 0 : i32
    return %c0_i32, %c0_i32_0 : i32, i32
  }
  func.func @transform_3(%arg0: i32, %arg1: i32) -> (i32, i32, i32) {
    %c0_i32 = arith.constant 0 : i32
    %c0_i32_0 = arith.constant 0 : i32
    return %arg0, %c0_i32, %arg1 : i32, i32, i32
  }
}

module attributes {stable_mosaic.version = 11 : i64} {
  func.func @_deconv_kernel(%arg0: i32, %arg1: i32, %arg2: memref<1x16x256xbf16, #tpu.memory_space<vmem>>, %arg3: memref<1x1x16x96xbf16, #tpu.memory_space<vmem>>, %arg4: memref<32x144xbf16, #tpu.memory_space<vmem>>, %arg5: memref<32x1xf32, #tpu.memory_space<vmem>>, %arg6: memref<1x32x256xbf16, #tpu.memory_space<vmem>>, %arg7: memref<144x256xbf16, #tpu.memory_space<vmem>>) attributes {dimension_semantics = [#tpu.dimension_semantics<parallel>, #tpu.dimension_semantics<parallel>], iteration_bounds = array<i64: 2, 2>, scalar_prefetch = 0 : i64, scratch_operands = 1 : i64, tpu.core_type = #tpu.core_type<tc>, window_params = [{transform_indices = @transform_0, window_bounds = array<i64: 1, 16, 256>}, {transform_indices = @transform_1, window_bounds = array<i64: 1, 1, 16, 96>}, {pipeline_mode = #tpu.pipeline_mode<synchronous>, transform_indices = @transform_2, window_bounds = array<i64: 32, 144>}, {pipeline_mode = #tpu.pipeline_mode<synchronous>, transform_indices = @transform_3, window_bounds = array<i64: 32, 1>}, {transform_indices = @transform_4, window_bounds = array<i64: 1, 32, 256>}]} {
    %c0 = arith.constant 0 : index
    %c0_0 = arith.constant 0 : index
    %c0_1 = arith.constant 0 : index
    %0 = vector.load %arg2[%c0, %c0_0, %c0_1] : memref<1x16x256xbf16, #tpu.memory_space<vmem>>, vector<1x16x256xbf16>
    %1 = vector.shape_cast %0 : vector<1x16x256xbf16> to vector<16x256xbf16>
    %c0_2 = arith.constant 0 : index
    %c0_3 = arith.constant 0 : index
    %c0_4 = arith.constant 0 : index
    %c0_5 = arith.constant 0 : index
    %2 = vector.load %arg3[%c0_2, %c0_3, %c0_4, %c0_5] : memref<1x1x16x96xbf16, #tpu.memory_space<vmem>>, vector<1x1x16x96xbf16>
    %3 = vector.shape_cast %2 : vector<1x1x16x96xbf16> to vector<16x96xbf16>
    %4 = tpu.concatenate %1, %3 in 1 : vector<16x256xbf16>, vector<16x96xbf16> -> vector<16x352xbf16>
    %5 = vector.extract_strided_slice %4 {offsets = [0, 0], sizes = [16, 256], strides = [1, 1]} : vector<16x352xbf16> to vector<16x256xbf16>
    %c0_6 = arith.constant 0 : index
    %c0_7 = arith.constant 0 : index
    %6 = vector.load %arg7[%c0_6, %c0_7] : memref<144x256xbf16, #tpu.memory_space<vmem>>, vector<16x256xbf16>
    tpu.vector_store %arg7[%c0_6, %c0_7], %5 {strides = array<i32>} : memref<144x256xbf16, #tpu.memory_space<vmem>>, vector<16x256xbf16>,
    %7 = vector.extract_strided_slice %4 {offsets = [0, 1], sizes = [16, 256], strides = [1, 1]} : vector<16x352xbf16> to vector<16x256xbf16>
    %c16 = arith.constant 16 : index
    %c0_8 = arith.constant 0 : index
    %8 = vector.load %arg7[%c16, %c0_8] : memref<144x256xbf16, #tpu.memory_space<vmem>>, vector<16x256xbf16>
    tpu.vector_store %arg7[%c16, %c0_8], %7 {strides = array<i32>} : memref<144x256xbf16, #tpu.memory_space<vmem>>, vector<16x256xbf16>,
    %9 = vector.extract_strided_slice %4 {offsets = [0, 2], sizes = [16, 256], strides = [1, 1]} : vector<16x352xbf16> to vector<16x256xbf16>
    %c32 = arith.constant 32 : index
    %c0_9 = arith.constant 0 : index
    %10 = vector.load %arg7[%c32, %c0_9] : memref<144x256xbf16, #tpu.memory_space<vmem>>, vector<16x256xbf16>
    tpu.vector_store %arg7[%c32, %c0_9], %9 {strides = array<i32>} : memref<144x256xbf16, #tpu.memory_space<vmem>>, vector<16x256xbf16>,
    %11 = vector.extract_strided_slice %4 {offsets = [0, 32], sizes = [16, 256], strides = [1, 1]} : vector<16x352xbf16> to vector<16x256xbf16>
    %c48 = arith.constant 48 : index
    %c0_10 = arith.constant 0 : index
    %12 = vector.load %arg7[%c48, %c0_10] : memref<144x256xbf16, #tpu.memory_space<vmem>>, vector<16x256xbf16>
    tpu.vector_store %arg7[%c48, %c0_10], %11 {strides = array<i32>} : memref<144x256xbf16, #tpu.memory_space<vmem>>, vector<16x256xbf16>,
    %13 = vector.extract_strided_slice %4 {offsets = [0, 33], sizes = [16, 256], strides = [1, 1]} : vector<16x352xbf16> to vector<16x256xbf16>
    %c64 = arith.constant 64 : index
    %c0_11 = arith.constant 0 : index
    %14 = vector.load %arg7[%c64, %c0_11] : memref<144x256xbf16, #tpu.memory_space<vmem>>, vector<16x256xbf16>
    tpu.vector_store %arg7[%c64, %c0_11], %13 {strides = array<i32>} : memref<144x256xbf16, #tpu.memory_space<vmem>>, vector<16x256xbf16>,
    %15 = vector.extract_strided_slice %4 {offsets = [0, 34], sizes = [16, 256], strides = [1, 1]} : vector<16x352xbf16> to vector<16x256xbf16>
    %c80 = arith.constant 80 : index
    %c0_12 = arith.constant 0 : index
    %16 = vector.load %arg7[%c80, %c0_12] : memref<144x256xbf16, #tpu.memory_space<vmem>>, vector<16x256xbf16>
    tpu.vector_store %arg7[%c80, %c0_12], %15 {strides = array<i32>} : memref<144x256xbf16, #tpu.memory_space<vmem>>, vector<16x256xbf16>,
    %17 = vector.extract_strided_slice %4 {offsets = [0, 64], sizes = [16, 256], strides = [1, 1]} : vector<16x352xbf16> to vector<16x256xbf16>
    %c96 = arith.constant 96 : index
    %c0_13 = arith.constant 0 : index
    %18 = vector.load %arg7[%c96, %c0_13] : memref<144x256xbf16, #tpu.memory_space<vmem>>, vector<16x256xbf16>
    tpu.vector_store %arg7[%c96, %c0_13], %17 {strides = array<i32>} : memref<144x256xbf16, #tpu.memory_space<vmem>>, vector<16x256xbf16>,
    %19 = vector.extract_strided_slice %4 {offsets = [0, 65], sizes = [16, 256], strides = [1, 1]} : vector<16x352xbf16> to vector<16x256xbf16>
    %c112 = arith.constant 112 : index
    %c0_14 = arith.constant 0 : index
    %20 = vector.load %arg7[%c112, %c0_14] : memref<144x256xbf16, #tpu.memory_space<vmem>>, vector<16x256xbf16>
    tpu.vector_store %arg7[%c112, %c0_14], %19 {strides = array<i32>} : memref<144x256xbf16, #tpu.memory_space<vmem>>, vector<16x256xbf16>,
    %21 = vector.extract_strided_slice %4 {offsets = [0, 66], sizes = [16, 256], strides = [1, 1]} : vector<16x352xbf16> to vector<16x256xbf16>
    %c128 = arith.constant 128 : index
    %c0_15 = arith.constant 0 : index
    %22 = vector.load %arg7[%c128, %c0_15] : memref<144x256xbf16, #tpu.memory_space<vmem>>, vector<16x256xbf16>
    tpu.vector_store %arg7[%c128, %c0_15], %21 {strides = array<i32>} : memref<144x256xbf16, #tpu.memory_space<vmem>>, vector<16x256xbf16>,
    %c0_16 = arith.constant 0 : index
    %c0_17 = arith.constant 0 : index
    %23 = vector.load %arg4[%c0_16, %c0_17] : memref<32x144xbf16, #tpu.memory_space<vmem>>, vector<32x144xbf16>
    %c0_18 = arith.constant 0 : index
    %c0_19 = arith.constant 0 : index
    %24 = vector.load %arg7[%c0_18, %c0_19] : memref<144x256xbf16, #tpu.memory_space<vmem>>, vector<144x256xbf16>
    %cst = arith.constant dense<0.000000e+00> : vector<32x256xf32>
    %25 = tpu.matmul %23, %24, %cst {dimension_numbers = #tpu.dot_dimension_numbers<[1], [0], [0], [1], [0, 0, 1, 1], [], []>} : vector<32x144xbf16>, vector<144x256xbf16>, vector<32x256xf32> -> vector<32x256xf32>
    %c0_20 = arith.constant 0 : index
    %c0_21 = arith.constant 0 : index
    %26 = vector.load %arg5[%c0_20, %c0_21] : memref<32x1xf32, #tpu.memory_space<vmem>>, vector<32x1xf32>
    %27 = vector.broadcast %26 : vector<32x1xf32> to vector<32x256xf32>
    %28 = arith.addf %25, %27 : vector<32x256xf32>
    %cst_22 = arith.constant 5.000000e-01 : f32
    %29 = vector.broadcast %cst_22 : f32 to vector<32x256xf32>
    %30 = arith.mulf %29, %28 : vector<32x256xf32>
    %31 = arith.mulf %28, %28 : vector<32x256xf32>
    %32 = arith.mulf %31, %28 : vector<32x256xf32>
    %cst_23 = arith.constant 4.471500e-02 : f32
    %33 = vector.broadcast %cst_23 : f32 to vector<32x256xf32>
    %34 = arith.mulf %33, %32 : vector<32x256xf32>
    %35 = arith.addf %28, %34 : vector<32x256xf32>
    %cst_24 = arith.constant 0.797884583 : f32
    %36 = vector.broadcast %cst_24 : f32 to vector<32x256xf32>
    %37 = arith.mulf %36, %35 : vector<32x256xf32>
    %38 = math.tanh %37 : vector<32x256xf32>
    %cst_25 = arith.constant 1.000000e+00 : f32
    %39 = vector.broadcast %cst_25 : f32 to vector<32x256xf32>
    %40 = arith.addf %39, %38 : vector<32x256xf32>
    %41 = arith.mulf %30, %40 : vector<32x256xf32>
    %42 = arith.truncf %41 : vector<32x256xf32> to vector<32x256xbf16>
    %c0_26 = arith.constant 0 : index
    %c0_27 = arith.constant 0 : index
    %c0_28 = arith.constant 0 : index
    %43 = vector.load %arg6[%c0_26, %c0_27, %c0_28] : memref<1x32x256xbf16, #tpu.memory_space<vmem>>, vector<1x32x256xbf16>
    %44 = vector.shape_cast %43 : vector<1x32x256xbf16> to vector<32x256xbf16>
    %45 = vector.shape_cast %42 : vector<32x256xbf16> to vector<1x32x256xbf16>
    tpu.vector_store %arg6[%c0_26, %c0_27, %c0_28], %45 {strides = array<i32>} : memref<1x32x256xbf16, #tpu.memory_space<vmem>>, vector<1x32x256xbf16>,
    return
  }
  func.func @transform_0(%arg0: i32, %arg1: i32) -> (i32, i32, i32) {
    %c0_i32 = arith.constant 0 : i32
    %c0_i32_0 = arith.constant 0 : i32
    return %arg0, %c0_i32, %arg1 : i32, i32, i32
  }
  func.func @transform_1(%arg0: i32, %arg1: i32) -> (i32, i32, i32, i32) {
    %c0_i32 = arith.constant 0 : i32
    %c0_i32_0 = arith.constant 0 : i32
    %c0_i32_1 = arith.constant 0 : i32
    return %arg0, %arg1, %c0_i32, %c0_i32_0 : i32, i32, i32, i32
  }
  func.func @transform_2(%arg0: i32, %arg1: i32) -> (i32, i32) {
    %c0_i32 = arith.constant 0 : i32
    %c0_i32_0 = arith.constant 0 : i32
    %c0_i32_1 = arith.constant 0 : i32
    return %c0_i32, %c0_i32_0 : i32, i32
  }
  func.func @transform_3(%arg0: i32, %arg1: i32) -> (i32, i32) {
    %c0_i32 = arith.constant 0 : i32
    %c0_i32_0 = arith.constant 0 : i32
    %c0_i32_1 = arith.constant 0 : i32
    return %c0_i32, %c0_i32_0 : i32, i32
  }
  func.func @transform_4(%arg0: i32, %arg1: i32) -> (i32, i32, i32) {
    %c0_i32 = arith.constant 0 : i32
    %c0_i32_0 = arith.constant 0 : i32
    return %arg0, %c0_i32, %arg1 : i32, i32, i32
  }
}

module attributes {stable_mosaic.version = 11 : i64} {
  func.func @_deconv_kernel(%arg0: i32, %arg1: i32, %arg2: memref<1x8x640xbf16, #tpu.memory_space<vmem>>, %arg3: memref<1x1x8x120xbf16, #tpu.memory_space<vmem>>, %arg4: memref<12x72xbf16, #tpu.memory_space<vmem>>, %arg5: memref<12x1xf32, #tpu.memory_space<vmem>>, %arg6: memref<1x12x640xf32, #tpu.memory_space<vmem>>, %arg7: memref<72x640xbf16, #tpu.memory_space<vmem>>) attributes {dimension_semantics = [#tpu.dimension_semantics<parallel>, #tpu.dimension_semantics<parallel>], iteration_bounds = array<i64: 2, 2>, scalar_prefetch = 0 : i64, scratch_operands = 1 : i64, tpu.core_type = #tpu.core_type<tc>, window_params = [{transform_indices = @transform_0, window_bounds = array<i64: 1, 8, 640>}, {transform_indices = @transform_1, window_bounds = array<i64: 1, 1, 8, 120>}, {pipeline_mode = #tpu.pipeline_mode<synchronous>, transform_indices = @transform_2, window_bounds = array<i64: 12, 72>}, {pipeline_mode = #tpu.pipeline_mode<synchronous>, transform_indices = @transform_3, window_bounds = array<i64: 12, 1>}, {transform_indices = @transform_4, window_bounds = array<i64: 1, 12, 640>}]} {
    %c0 = arith.constant 0 : index
    %c0_0 = arith.constant 0 : index
    %c0_1 = arith.constant 0 : index
    %0 = vector.load %arg2[%c0, %c0_0, %c0_1] : memref<1x8x640xbf16, #tpu.memory_space<vmem>>, vector<1x8x640xbf16>
    %1 = vector.shape_cast %0 : vector<1x8x640xbf16> to vector<8x640xbf16>
    %c0_2 = arith.constant 0 : index
    %c0_3 = arith.constant 0 : index
    %c0_4 = arith.constant 0 : index
    %c0_5 = arith.constant 0 : index
    %2 = vector.load %arg3[%c0_2, %c0_3, %c0_4, %c0_5] : memref<1x1x8x120xbf16, #tpu.memory_space<vmem>>, vector<1x1x8x120xbf16>
    %3 = vector.shape_cast %2 : vector<1x1x8x120xbf16> to vector<8x120xbf16>
    %4 = tpu.concatenate %1, %3 in 1 : vector<8x640xbf16>, vector<8x120xbf16> -> vector<8x760xbf16>
    %5 = vector.extract_strided_slice %4 {offsets = [0, 0], sizes = [8, 640], strides = [1, 1]} : vector<8x760xbf16> to vector<8x640xbf16>
    %c0_6 = arith.constant 0 : index
    %c0_7 = arith.constant 0 : index
    %6 = vector.load %arg7[%c0_6, %c0_7] : memref<72x640xbf16, #tpu.memory_space<vmem>>, vector<8x640xbf16>
    tpu.vector_store %arg7[%c0_6, %c0_7], %5 {strides = array<i32>} : memref<72x640xbf16, #tpu.memory_space<vmem>>, vector<8x640xbf16>,
    %7 = vector.extract_strided_slice %4 {offsets = [0, 1], sizes = [8, 640], strides = [1, 1]} : vector<8x760xbf16> to vector<8x640xbf16>
    %c8 = arith.constant 8 : index
    %c0_8 = arith.constant 0 : index
    %8 = vector.load %arg7[%c8, %c0_8] : memref<72x640xbf16, #tpu.memory_space<vmem>>, vector<8x640xbf16>
    tpu.vector_store %arg7[%c8, %c0_8], %7 {strides = array<i32>} : memref<72x640xbf16, #tpu.memory_space<vmem>>, vector<8x640xbf16>,
    %9 = vector.extract_strided_slice %4 {offsets = [0, 2], sizes = [8, 640], strides = [1, 1]} : vector<8x760xbf16> to vector<8x640xbf16>
    %c16 = arith.constant 16 : index
    %c0_9 = arith.constant 0 : index
    %10 = vector.load %arg7[%c16, %c0_9] : memref<72x640xbf16, #tpu.memory_space<vmem>>, vector<8x640xbf16>
    tpu.vector_store %arg7[%c16, %c0_9], %9 {strides = array<i32>} : memref<72x640xbf16, #tpu.memory_space<vmem>>, vector<8x640xbf16>,
    %11 = vector.extract_strided_slice %4 {offsets = [0, 40], sizes = [8, 640], strides = [1, 1]} : vector<8x760xbf16> to vector<8x640xbf16>
    %c24 = arith.constant 24 : index
    %c0_10 = arith.constant 0 : index
    %12 = vector.load %arg7[%c24, %c0_10] : memref<72x640xbf16, #tpu.memory_space<vmem>>, vector<8x640xbf16>
    tpu.vector_store %arg7[%c24, %c0_10], %11 {strides = array<i32>} : memref<72x640xbf16, #tpu.memory_space<vmem>>, vector<8x640xbf16>,
    %13 = vector.extract_strided_slice %4 {offsets = [0, 41], sizes = [8, 640], strides = [1, 1]} : vector<8x760xbf16> to vector<8x640xbf16>
    %c32 = arith.constant 32 : index
    %c0_11 = arith.constant 0 : index
    %14 = vector.load %arg7[%c32, %c0_11] : memref<72x640xbf16, #tpu.memory_space<vmem>>, vector<8x640xbf16>
    tpu.vector_store %arg7[%c32, %c0_11], %13 {strides = array<i32>} : memref<72x640xbf16, #tpu.memory_space<vmem>>, vector<8x640xbf16>,
    %15 = vector.extract_strided_slice %4 {offsets = [0, 42], sizes = [8, 640], strides = [1, 1]} : vector<8x760xbf16> to vector<8x640xbf16>
    %c40 = arith.constant 40 : index
    %c0_12 = arith.constant 0 : index
    %16 = vector.load %arg7[%c40, %c0_12] : memref<72x640xbf16, #tpu.memory_space<vmem>>, vector<8x640xbf16>
    tpu.vector_store %arg7[%c40, %c0_12], %15 {strides = array<i32>} : memref<72x640xbf16, #tpu.memory_space<vmem>>, vector<8x640xbf16>,
    %17 = vector.extract_strided_slice %4 {offsets = [0, 80], sizes = [8, 640], strides = [1, 1]} : vector<8x760xbf16> to vector<8x640xbf16>
    %c48 = arith.constant 48 : index
    %c0_13 = arith.constant 0 : index
    %18 = vector.load %arg7[%c48, %c0_13] : memref<72x640xbf16, #tpu.memory_space<vmem>>, vector<8x640xbf16>
    tpu.vector_store %arg7[%c48, %c0_13], %17 {strides = array<i32>} : memref<72x640xbf16, #tpu.memory_space<vmem>>, vector<8x640xbf16>,
    %19 = vector.extract_strided_slice %4 {offsets = [0, 81], sizes = [8, 640], strides = [1, 1]} : vector<8x760xbf16> to vector<8x640xbf16>
    %c56 = arith.constant 56 : index
    %c0_14 = arith.constant 0 : index
    %20 = vector.load %arg7[%c56, %c0_14] : memref<72x640xbf16, #tpu.memory_space<vmem>>, vector<8x640xbf16>
    tpu.vector_store %arg7[%c56, %c0_14], %19 {strides = array<i32>} : memref<72x640xbf16, #tpu.memory_space<vmem>>, vector<8x640xbf16>,
    %21 = vector.extract_strided_slice %4 {offsets = [0, 82], sizes = [8, 640], strides = [1, 1]} : vector<8x760xbf16> to vector<8x640xbf16>
    %c64 = arith.constant 64 : index
    %c0_15 = arith.constant 0 : index
    %22 = vector.load %arg7[%c64, %c0_15] : memref<72x640xbf16, #tpu.memory_space<vmem>>, vector<8x640xbf16>
    tpu.vector_store %arg7[%c64, %c0_15], %21 {strides = array<i32>} : memref<72x640xbf16, #tpu.memory_space<vmem>>, vector<8x640xbf16>,
    %c0_16 = arith.constant 0 : index
    %c0_17 = arith.constant 0 : index
    %23 = vector.load %arg4[%c0_16, %c0_17] : memref<12x72xbf16, #tpu.memory_space<vmem>>, vector<12x72xbf16>
    %c0_18 = arith.constant 0 : index
    %c0_19 = arith.constant 0 : index
    %24 = vector.load %arg7[%c0_18, %c0_19] : memref<72x640xbf16, #tpu.memory_space<vmem>>, vector<72x640xbf16>
    %cst = arith.constant dense<0.000000e+00> : vector<12x640xf32>
    %25 = tpu.matmul %23, %24, %cst {dimension_numbers = #tpu.dot_dimension_numbers<[1], [0], [0], [1], [0, 0, 1, 1], [], []>} : vector<12x72xbf16>, vector<72x640xbf16>, vector<12x640xf32> -> vector<12x640xf32>
    %c0_20 = arith.constant 0 : index
    %c0_21 = arith.constant 0 : index
    %26 = vector.load %arg5[%c0_20, %c0_21] : memref<12x1xf32, #tpu.memory_space<vmem>>, vector<12x1xf32>
    %27 = vector.broadcast %26 : vector<12x1xf32> to vector<12x640xf32>
    %28 = arith.addf %25, %27 : vector<12x640xf32>
    %cst_22 = arith.constant 5.000000e-01 : f32
    %29 = vector.broadcast %cst_22 : f32 to vector<12x640xf32>
    %30 = arith.mulf %29, %28 : vector<12x640xf32>
    %31 = arith.mulf %28, %28 : vector<12x640xf32>
    %32 = arith.mulf %31, %28 : vector<12x640xf32>
    %cst_23 = arith.constant 4.471500e-02 : f32
    %33 = vector.broadcast %cst_23 : f32 to vector<12x640xf32>
    %34 = arith.mulf %33, %32 : vector<12x640xf32>
    %35 = arith.addf %28, %34 : vector<12x640xf32>
    %cst_24 = arith.constant 0.797884583 : f32
    %36 = vector.broadcast %cst_24 : f32 to vector<12x640xf32>
    %37 = arith.mulf %36, %35 : vector<12x640xf32>
    %38 = math.tanh %37 : vector<12x640xf32>
    %cst_25 = arith.constant 1.000000e+00 : f32
    %39 = vector.broadcast %cst_25 : f32 to vector<12x640xf32>
    %40 = arith.addf %39, %38 : vector<12x640xf32>
    %41 = arith.mulf %30, %40 : vector<12x640xf32>
    %c0_26 = arith.constant 0 : index
    %c0_27 = arith.constant 0 : index
    %c0_28 = arith.constant 0 : index
    %42 = vector.load %arg6[%c0_26, %c0_27, %c0_28] : memref<1x12x640xf32, #tpu.memory_space<vmem>>, vector<1x12x640xf32>
    %43 = vector.shape_cast %42 : vector<1x12x640xf32> to vector<12x640xf32>
    %44 = vector.shape_cast %41 : vector<12x640xf32> to vector<1x12x640xf32>
    tpu.vector_store %arg6[%c0_26, %c0_27, %c0_28], %44 {strides = array<i32>} : memref<1x12x640xf32, #tpu.memory_space<vmem>>, vector<1x12x640xf32>,
    return
  }
  func.func @transform_0(%arg0: i32, %arg1: i32) -> (i32, i32, i32) {
    %c0_i32 = arith.constant 0 : i32
    %c0_i32_0 = arith.constant 0 : i32
    return %arg0, %c0_i32, %arg1 : i32, i32, i32
  }
  func.func @transform_1(%arg0: i32, %arg1: i32) -> (i32, i32, i32, i32) {
    %c0_i32 = arith.constant 0 : i32
    %c0_i32_0 = arith.constant 0 : i32
    %c0_i32_1 = arith.constant 0 : i32
    return %arg0, %arg1, %c0_i32, %c0_i32_0 : i32, i32, i32, i32
  }
  func.func @transform_2(%arg0: i32, %arg1: i32) -> (i32, i32) {
    %c0_i32 = arith.constant 0 : i32
    %c0_i32_0 = arith.constant 0 : i32
    %c0_i32_1 = arith.constant 0 : i32
    return %c0_i32, %c0_i32_0 : i32, i32
  }
  func.func @transform_3(%arg0: i32, %arg1: i32) -> (i32, i32) {
    %c0_i32 = arith.constant 0 : i32
    %c0_i32_0 = arith.constant 0 : i32
    %c0_i32_1 = arith.constant 0 : i32
    return %c0_i32, %c0_i32_0 : i32, i32
  }
  func.func @transform_4(%arg0: i32, %arg1: i32) -> (i32, i32, i32) {
    %c0_i32 = arith.constant 0 : i32
    %c0_i32_0 = arith.constant 0 : i32
    return %arg0, %c0_i32, %arg1 : i32, i32, i32
  }
}

</mosaic_0001>

<llo_original>
// kernel: tile.1
$region0: #{tile.1}
  %s0 = inlined_call_operand.vmem [shape: f32[4,3], index: 0, kind: input, shape index: {}]
  %s1 = inlined_call_operand.vmem [shape: f32[12,1], index: 1, kind: output, shape index: {}]
  $region1: #{tile.1} parent=0
    #allocation0 [shape = 'u8[4096]{0}', space=vmem, size = 0x1000, scoped, tag = 'scoped mem for input reshape']
    %s3 = sshllo.u32 0, 4
    %v4 = vld [vmem:[%s0] sm:%s3]
    %5 = vst [vmem:[#allocation0] sm:%s3] %v4
    %v6 = vld [vmem:[#allocation0] sm:$0xf]
    %vm7 = vcmask 7168
    %8 = vst.msk [vmem:[%s1] ss:$3 sm:$0xf] %vm7, %v6
    %v9 = vld [vmem:[#allocation0] sm:$0xf]
    %10 = vrot.lane.b32.xlu0 %v9, 127
    %v11 = vpop.permute.xlu0 %10
    %vm12 = vcmask 7168
    %s13 = scalar_lea.vmem %s1, 1
    %14 = vst.msk [vmem:[%s13] ss:$3 sm:$0xf] %vm12, %v11
    %v15 = vld [vmem:[#allocation0] sm:$0xf]
    %16 = vrot.lane.b32.xlu0 %v15, 126
    %v17 = vpop.permute.xlu0 %16
    %vm18 = vcmask 7168
    %s19 = scalar_lea.vmem %s1, 2
    %20 = vst.msk [vmem:[%s19] ss:$3 sm:$0xf] %vm18, %v17

// kernel: tile.18
$region0: #{tile.18}
  #allocation2 [shape = 's32[1]{0}', space=sflag, size = 0x4, scoped, tag = 'scoped memory for tile.18']
  %s0 = inlined_call_operand.hbm [shape: f32[3], index: 0, kind: input, shape index: {}]
  %s1 = inlined_call_operand.vmem [shape: f32[4,3], index: 1, kind: output, shape index: {}]
  $region1: #{tile.18} parent=0
    #allocation0 [shape = 'u8[512]{0}', space=vmem, size = 0x400, scoped, tag = 'operand span for operand 0']
    #allocation1 [shape = 's32[1]{0}', space=sflag, size = 0x4, scoped, tag = 'scoped memory for tile.18']
    %2 = vsyncpa [#allocation1], 0
    // Predicated region
    $region2: #{tile.18} parent=1 // pred_check
      _
    $region3: #{tile.18} parent=1 // pred_check_branch
      %4 = sbr.rel (0) target = $region5
    $region4: #{tile.18} parent=1 // pred_region
      %s6 = ssub.s32 16, 16
      %7 = vsyncadd [#allocation1], %s6
      %s9 = sshll.u32 [#allocation0], 4
      %s10 = int_to_ptr.vmem [resolvable:$true] %s9
      %12 = dma.hbm_to_vmem [thread:$0]  %s0, 16, %s10, [#allocation1]
    $region5: #{tile.18} parent=1 // pred_fallthru
      _
    // Predicated region
    $region6: #{tile.18} parent=1 // pred_check
      _
    $region7: #{tile.18} parent=1 // pred_check_branch
      %14 = sbr.rel (0) target = $region9
    $region8: #{tile.18} parent=1 // pred_region
      %15 = dma.done [#allocation1], 16
    $region9: #{tile.18} parent=1 // pred_fallthru
      _
    %v16 = vld [vmem:[#allocation0] ss:$0 sm:$0xff]
    %17 = vst [vmem:[%s1] sm:$0xf] %v16
    %18 = vsyncpa [#allocation1], 1

// kernel: tile.13
$region0: #{tile.13}
  #allocation2 [shape = 's32[1]{0}', space=sflag, size = 0x4, scoped, tag = 'scoped memory for tile.13']
  %s0 = inlined_call_operand.hbm [shape: f32[8], index: 0, kind: input, shape index: {}]
  %s1 = inlined_call_operand.vmem [shape: f32[4,8], index: 1, kind: output, shape index: {}]
  $region1: #{tile.13} parent=0
    #allocation0 [shape = 'u8[512]{0}', space=vmem, size = 0x400, scoped, tag = 'operand span for operand 0']
    #allocation1 [shape = 's32[1]{0}', space=sflag, size = 0x4, scoped, tag = 'scoped memory for tile.13']
    %2 = vsyncpa [#allocation1], 0
    // Predicated region
    $region2: #{tile.13} parent=1 // pred_check
      _
    $region3: #{tile.13} parent=1 // pred_check_branch
      %4 = sbr.rel (0) target = $region5
    $region4: #{tile.13} parent=1 // pred_region
      %s6 = ssub.s32 16, 16
      %7 = vsyncadd [#allocation1], %s6
      %s9 = sshll.u32 [#allocation0], 4
      %s10 = int_to_ptr.vmem [resolvable:$true] %s9
      %12 = dma.hbm_to_vmem [thread:$0]  %s0, 16, %s10, [#allocation1]
    $region5: #{tile.13} parent=1 // pred_fallthru
      _
    // Predicated region
    $region6: #{tile.13} parent=1 // pred_check
      _
    $region7: #{tile.13} parent=1 // pred_check_branch
      %14 = sbr.rel (0) target = $region9
    $region8: #{tile.13} parent=1 // pred_region
      %15 = dma.done [#allocation1], 16
    $region9: #{tile.13} parent=1 // pred_fallthru
      _
    %v16 = vld [vmem:[#allocation0] ss:$0 sm:$0xff]
    %17 = vst [vmem:[%s1] sm:$0xf] %v16
    %18 = vsyncpa [#allocation1], 1

// kernel: tile.0
$region0: #{tile.0}
  %s0 = inlined_call_operand.vmem [shape: f32[4,8], index: 0, kind: input, shape index: {}]
  %s1 = inlined_call_operand.vmem [shape: f32[32,1], index: 1, kind: output, shape index: {}]
  $region1: #{tile.0} parent=0
    #allocation0 [shape = 'u8[4096]{0}', space=vmem, size = 0x1000, scoped, tag = 'scoped mem for input reshape']
    %s3 = sshllo.u32 0, 4
    %v4 = vld [vmem:[%s0] sm:%s3]
    %5 = vst [vmem:[#allocation0] sm:%s3] %v4
    %v6 = vld [vmem:[#allocation0] sm:$0xf]
    %vm7 = vcmask 7168
    %8 = vst.msk [vmem:[%s1] ss:$8 sm:$0xf] %vm7, %v6
    %v9 = vld [vmem:[#allocation0] sm:$0xf]
    %10 = vrot.lane.b32.xlu0 %v9, 127
    %v11 = vpop.permute.xlu0 %10
    %vm12 = vcmask 7168
    %s13 = scalar_lea.vmem %s1, 1
    %14 = vst.msk [vmem:[%s13] ss:$8 sm:$0xf] %vm12, %v11
    %v15 = vld [vmem:[#allocation0] sm:$0xf]
    %16 = vrot.lane.b32.xlu0 %v15, 126
    %v17 = vpop.permute.xlu0 %16
    %vm18 = vcmask 7168
    %s19 = scalar_lea.vmem %s1, 2
    %20 = vst.msk [vmem:[%s19] ss:$8 sm:$0xf] %vm18, %v17
    %v21 = vld [vmem:[#allocation0] sm:$0xf]
    %22 = vrot.lane.b32.xlu0 %v21, 125
    %v23 = vpop.permute.xlu0 %22
    %vm24 = vcmask 7168
    %s25 = scalar_lea.vmem %s1, 3
    %26 = vst.msk [vmem:[%s25] ss:$8 sm:$0xf] %vm24, %v23
    %v27 = vld [vmem:[#allocation0] sm:$0xf]
    %28 = vrot.lane.b32.xlu0 %v27, 124
    %v29 = vpop.permute.xlu0 %28
    %vm30 = vcmask 7168
    %s31 = scalar_lea.vmem %s1, 4
    %32 = vst.msk [vmem:[%s31] ss:$8 sm:$0xf] %vm30, %v29
    %v33 = vld [vmem:[#allocation0] sm:$0xf]
    %34 = vrot.lane.b32.xlu0 %v33, 123
    %v35 = vpop.permute.xlu0 %34
    %vm36 = vcmask 7168
    %s37 = scalar_lea.vmem %s1, 5
    %38 = vst.msk [vmem:[%s37] ss:$8 sm:$0xf] %vm36, %v35
    %v39 = vld [vmem:[#allocation0] sm:$0xf]
    %40 = vrot.lane.b32.xlu0 %v39, 122
    %v41 = vpop.permute.xlu0 %40
    %vm42 = vcmask 7168
    %s43 = scalar_lea.vmem %s1, 6
    %44 = vst.msk [vmem:[%s43] ss:$8 sm:$0xf] %vm42, %v41
    %v45 = vld [vmem:[#allocation0] sm:$0xf]
    %46 = vrot.lane.b32.xlu0 %v45, 121
    %v47 = vpop.permute.xlu0 %46
    %vm48 = vcmask 7168
    %s49 = scalar_lea.vmem %s1, 7
    %50 = vst.msk [vmem:[%s49] ss:$8 sm:$0xf] %vm48, %v47

// kernel: convs_out.3
$region0: #{convs_out.3}
  #allocation0 [shape = 'u32[]', space=smem, size = 0x4, offset = 0x4, fixed_abs, tag = 'smem constant byte address 0x4 - core index']
  #allocation1 [shape = 'u32[144,128]{1,0:T(1,128)}', space=vmem, size = 0x12000, scoped, tag = 'internal scratch']
  %s0 = inlined_call_operand.vmem [shape: f32[2,24,256], index: 0, kind: input, shape index: {}]
  %s1 = inlined_call_operand.vmem [shape: bf16[12,24], index: 1, kind: input, shape index: {}]
  %s2 = inlined_call_operand.vmem [shape: f32[12,1], index: 2, kind: input, shape index: {}]
  %s3 = inlined_call_operand.vmem [shape: bf16[2,12,256], index: 3, kind: output, shape index: {}]
  %s4 = sld [smem:[#allocation0]]
  $region45: #{convs_out.3} parent=0
    _
  %s6 = ssub.s32 1, %s4
  %s7 = scalar_select 0, %s6, %s4
  loop: start=0, step=1, limit=4
  $region2: #{convs_out.3} parent=0 // loop_pre_header
    _
  $region3: #{convs_out.3} parent=0 // loop_header
    %s9 = sphi 0, %s13
    %p10 = scmp.ge.s32.totalorder %s9, 4
    %s16 = sphi 0, %s28
    %s17 = sphi 0, %s24
    %s18 = sphi 0, %s16
    %s19 = sphi 0, %s17
    %s20 = sphi 0, %s18
    %s21 = sphi 0, %s19
    %s33 = sphi 0, %s35
    %s36 = sphi 0, %s33
    %s37 = sphi 0, %s36
    %s53 = sphi 0, %s37
    %s57 = sphi 0, %s57
    %s59 = sphi 0, %s57
    %s60 = sphi 0, %s59
    %s74 = sphi 0, %s60
    %s78 = sphi 0, %s78
    %s80 = sphi 0, %s78
    %s81 = sphi 0, %s80
    %s95 = sphi 0, %s81
    %s103 = sphi 0, %s105
    %s106 = sphi 0, %s103
    %s107 = sphi 0, %s106
    %s123 = sphi 0, %s107
  $region4: #{convs_out.3} parent=0 // loop_header_branch
    %12 = sbr.rel (%p10) target = $region8
  $region5: #{convs_out.3} parent=0 // loop_body
    %s14 = ssub.s32 %s9, 1
    %s15 = ssub.s32 %s9, 2
    %s22 = sadd.s32 1, %s17
    %p23 = scmp.ge.s32.totalorder %s22, 1
    %s24 = scalar_select %p23, 0, %s22
    %s25 = sadd.s32 1, %s16
    %s26 = scalar_select %p23, %s25, %s16
    %p27 = scmp.ge.s32.totalorder %s26, 2
    %s28 = scalar_select %p27, 0, %s26
    %s29 = ssub.s32 %s16, %s28
    %s30 = ssub.s32 %s17, %s24
    %s31 = sor.u32 %s29, %s30
    %p32 = scmp.eq.s32.totalorder %s31, 0
    %s34 = sadd.s32 %s33, 1
    %s35 = scalar_select %p32, %s33, %s34
    %p38 = pneg %p32
    %p39 = scmp.eq.s32.totalorder %s9, 1
    %p40 = por %p38, %p39
    %p41 = scmp.ne.s32.totalorder %s33, %s36
    %p42 = scmp.eq.s32.totalorder %s9, 0
    %p43 = por %p41, %p42
    %p44 = scmp.ne.s32.totalorder %s33, %s36
    %p45 = scmp.eq.s32.totalorder %s14, 1
    %p46 = por %p44, %p45
    %p47 = scmp.ne.s32.totalorder %s36, %s37
    %p48 = scmp.eq.s32.totalorder %s14, 0
    %p49 = por %p47, %p48
    %p50 = scmp.ne.s32.totalorder %s36, %s37
    %p51 = scmp.eq.s32.totalorder %s15, 1
    %p52 = por %p50, %p51
    %p54 = scmp.ne.s32.totalorder %s37, %s53
    %p55 = scmp.eq.s32.totalorder %s15, 0
    %p56 = por %p54, %p55
    %s58 = sadd.s32 %s57, 1
    %p61 = scmp.eq.s32.totalorder %s9, 1
    %p62 = scmp.ne.s32.totalorder %s57, %s59
    %p63 = scmp.eq.s32.totalorder %s9, 0
    %p64 = por %p62, %p63
    %p65 = scmp.ne.s32.totalorder %s57, %s59
    %p66 = scmp.eq.s32.totalorder %s14, 1
    %p67 = por %p65, %p66
    %p68 = scmp.ne.s32.totalorder %s59, %s60
    %p69 = scmp.eq.s32.totalorder %s14, 0
    %p70 = por %p68, %p69
    %p71 = scmp.ne.s32.totalorder %s59, %s60
    %p72 = scmp.eq.s32.totalorder %s15, 1
    %p73 = por %p71, %p72
    %p75 = scmp.ne.s32.totalorder %s60, %s74
    %p76 = scmp.eq.s32.totalorder %s15, 0
    %p77 = por %p75, %p76
    %s79 = sadd.s32 %s78, 1
    %p82 = scmp.eq.s32.totalorder %s9, 1
    %p83 = scmp.ne.s32.totalorder %s78, %s80
    %p84 = scmp.eq.s32.totalorder %s9, 0
    %p85 = por %p83, %p84
    %p86 = scmp.ne.s32.totalorder %s78, %s80
    %p87 = scmp.eq.s32.totalorder %s14, 1
    %p88 = por %p86, %p87
    %p89 = scmp.ne.s32.totalorder %s80, %s81
    %p90 = scmp.eq.s32.totalorder %s14, 0
    %p91 = por %p89, %p90
    %p92 = scmp.ne.s32.totalorder %s80, %s81
    %p93 = scmp.eq.s32.totalorder %s15, 1
    %p94 = por %p92, %p93
    %p96 = scmp.ne.s32.totalorder %s81, %s95
    %p97 = scmp.eq.s32.totalorder %s15, 0
    %p98 = por %p96, %p97
    %s99 = ssub.s32 %s16, %s28
    %s100 = ssub.s32 %s17, %s24
    %s101 = sor.u32 %s99, %s100
    %p102 = scmp.eq.s32.totalorder %s101, 0
    %s104 = sadd.s32 %s103, 1
    %s105 = scalar_select %p102, %s103, %s104
    %p108 = pneg %p102
    %p109 = scmp.eq.s32.totalorder %s9, 1
    %p110 = por %p108, %p109
    %p111 = scmp.ne.s32.totalorder %s103, %s106
    %p112 = scmp.eq.s32.totalorder %s9, 0
    %p113 = por %p111, %p112
    %p114 = scmp.ne.s32.totalorder %s103, %s106
    %p115 = scmp.eq.s32.totalorder %s14, 1
    %p116 = por %p114, %p115
    %p117 = scmp.ne.s32.totalorder %s106, %s107
    %p118 = scmp.eq.s32.totalorder %s14, 0
    %p119 = por %p117, %p118
    %p120 = scmp.ne.s32.totalorder %s106, %s107
    %p121 = scmp.eq.s32.totalorder %s15, 1
    %p122 = por %p120, %p121
    %p124 = scmp.ne.s32.totalorder %s107, %s123
    %p125 = scmp.eq.s32.totalorder %s15, 0
    %p126 = por %p124, %p125
    %p127 = scmp.le.s32.totalorder 1, %s9
    %p128 = scmp.lt.s32.totalorder %s9, 3
    %p129 = pnand %p127, %p128
    %p130 = pneg %p129
    // Predicated region
    $region9: #{convs_out.3} parent=5 // pred_check
      _
    $region10: #{convs_out.3} parent=5 // pred_check_branch
      %132 = sbr.rel (%p129) target = $region12
    $region11: #{convs_out.3} parent=5 // pred_region
      %s133 = ssub.s32 %s9, 1
      // Predicated region
      $region13: #{convs_out.3} parent=11 // pred_check
        %p134 = pneg %p70
      $region14: #{convs_out.3} parent=11 // pred_check_branch
        %136 = sbr.rel (%p134) target = $region16
      $region15: #{convs_out.3} parent=11 // pred_region
        _
      $region16: #{convs_out.3} parent=11 // pred_fallthru
        _
      // Predicated region
      $region17: #{convs_out.3} parent=11 // pred_check
        %p137 = pneg %p91
      $region18: #{convs_out.3} parent=11 // pred_check_branch
        %139 = sbr.rel (%p137) target = $region20
      $region19: #{convs_out.3} parent=11 // pred_region
        _
      $region20: #{convs_out.3} parent=11 // pred_fallthru
        _
    $region12: #{convs_out.3} parent=5 // pred_fallthru
      _
    %p140 = scmp.lt.s32.totalorder %s9, 2
    // Predicated region
    $region21: #{convs_out.3} parent=5 // pred_check
      %p141 = pneg %p140
    $region22: #{convs_out.3} parent=5 // pred_check_branch
      %143 = sbr.rel (%p141) target = $region24
    $region23: #{convs_out.3} parent=5 // pred_region
      // Predicated region
      $region25: #{convs_out.3} parent=23 // pred_check
        %p144 = pneg %p43
      $region26: #{convs_out.3} parent=23 // pred_check_branch
        %146 = sbr.rel (%p144) target = $region28
      $region27: #{convs_out.3} parent=23 // pred_region
        %s147 = smul.u32 2, %s17
        %p148 = scmp.lt.s32.totalorder %s16, 1
        %s149 = scalar_select %p148, %s16, 1
        %p150 = scmp.lt.s32.totalorder %s147, 1
        %s151 = scalar_select %p150, %s147, 1
        %s152 = smul.addr %s149, 6
        %s153 = sadd.s32 %s151, %s152
        %s154 = smul.addr %s153, 8
        %s155 = scalar_lea.vmem %s0, %s154
        %s156 = smul.u32 2, %s17
      $region28: #{convs_out.3} parent=23 // pred_fallthru
        _
    $region24: #{convs_out.3} parent=5 // pred_fallthru
      _
    %p157 = scmp.le.s32.totalorder 1, %s9
    %p158 = scmp.lt.s32.totalorder %s9, 3
    %p159 = pnand %p157, %p158
    %p160 = pneg %p159
    // Predicated region
    $region29: #{convs_out.3} parent=5 // pred_check
      _
    $region30: #{convs_out.3} parent=5 // pred_check_branch
      %162 = sbr.rel (%p159) target = $region32
    $region31: #{convs_out.3} parent=5 // pred_region
      %s163 = ssub.s32 %s9, 1
      %s164 = smul.u32 2, %s19
      %p165 = scmp.lt.s32.totalorder %s18, 1
      %s166 = scalar_select %p165, %s18, 1
      %p167 = scmp.lt.s32.totalorder %s164, 1
      %s168 = scalar_select %p167, %s164, 1
      %s169 = smul.addr %s166, 6
      %s170 = sadd.s32 %s168, %s169
      %s171 = smul.addr %s170, 8
      %s172 = scalar_lea.vmem %s0, %s171
      %p173 = pneg %p49
      %p174 = pneg %p46
      %p175 = pneg %p70
      %p176 = pneg %p67
      %p177 = pneg %p91
      %p178 = pneg %p88
      %p179 = pneg %p119
      %p180 = pneg %p116
      %s181 = smul.u32 2, %s19
      %p182 = scmp.lt.s32.totalorder %s18, 1
      %s183 = scalar_select %p182, %s18, 1
      %p184 = scmp.lt.s32.totalorder %s181, 1
      %s185 = scalar_select %p184, %s181, 1
      %s186 = smul.addr %s183, 4
      %s187 = sadd.s32 %s185, %s186
      %s188 = smul.addr %s187, 4
      %s189 = scalar_lea.vmem %s3, %s188
      %s190 = smul.u32 2, %s19
      %p191 = scmp.lt.s32.totalorder %s18, 1
      %s192 = scalar_select %p191, %s18, 1
      %p193 = scmp.lt.s32.totalorder %s190, 1
      %s194 = scalar_select %p193, %s190, 1
      %s195 = smul.addr %s192, 6
      %s196 = sadd.s32 %s194, %s195
      %s197 = smul.addr %s196, 8
      %s198 = scalar_lea.vmem %s0, %s197
      %s199 = smul.u32 2, %s19
      %s200 = smul.u32 2, %s19
      %p201 = scmp.lt.s32.totalorder %s18, 1
      %s202 = scalar_select %p201, %s18, 1
      %p203 = scmp.lt.s32.totalorder %s200, 1
      %s204 = scalar_select %p203, %s200, 1
      %s205 = smul.addr %s202, 4
      %s206 = sadd.s32 %s204, %s205
      %s207 = smul.addr %s206, 4
      %s208 = scalar_lea.vmem %s3, %s207
      %s209 = smul.u32 2, %s19
      %v211 = vld [vmem:[%s198] sm:$0xff]
      %v212 = vld [vmem:[%s198 + $0x8] sm:$0xff]
      %v213 = vld [vmem:[%s198 + $0x10] sm:$0xff]
      %v214 = vld [vmem:[%s198 + $0x18] sm:$0xff]
      %v215 = vld [vmem:[%s198 + $0x20] sm:$0xff]
      %v216 = vld [vmem:[%s198 + $0x28] sm:$0xff]
      %v217 = vpack.c.bf16 %v213, %v211
      %v218 = vpack.c.bf16 %v214, %v212
      %v219 = vpack.c.bf16 %v215, %v215
      %v220 = vpack.c.bf16 %v216, %v216
      %v221 = vld [vmem:[%s1] sm:$0xf]
      %v222 = vld [vmem:[%s1 + $0x4] sm:$0x3]
      %v223 = vld [vmem:[%s2] sm:$0xff]
      %v224 = vld [vmem:[%s2 + $0x8] sm:$0xf]
      %226 = vset.pattern.permute.xlu0 0
      %227 = vperm.xlu0 %226, %v223
      %v228 = vpop.permute.xlu0 %227
      %231 = vset.pattern.permute.xlu0 0
      %232 = vperm.xlu0 %231, %v224
      %v233 = vpop.permute.xlu0 %232
      %v237 = vunpack.c.l.b16 %v221
      %v238 = vunpack.c.l.b16 %v222
      %v239 = vpack.c.b16 %v238, %v237
      %vm240 = vcmask 195584
      %v242 = vsel %vm240, %v239, 0
      %vm244 = vcmask 1043456
      %v246 = vsel %vm244, %v219, 0
      %v249 = vsel %vm244, %v220, 0
      %251 = vmatprep.subr.bf16.mxu0 %v218
      %252 = vmatpush1.bf16.msra.mxu0 %v217
      %253 = vmatprep.subr.bf16.mxu0 %v249
      %254 = vmatpush1.bf16.msra.mxu0 %v246
      %255 = vmatprep.subr.bf16.mxu0 0
      %256 = vmatpush1.bf16.msra.mxu0 0
      %257 = vmatprep.subr.bf16.mxu0 0
      %258 = vmatpush1.bf16.msra.mxu0 0
      %259 = vmatprep.subr.bf16.mxu0 0
      %260 = vmatpush1.bf16.msra.mxu0 0
      %261 = vmatprep.subr.bf16.mxu0 0
      %262 = vmatpush1.bf16.msra.mxu0 0
      %263 = vmatprep.subr.bf16.mxu0 0
      %264 = vmatpush1.bf16.msra.mxu0 0
      %265 = vmatprep.subr.bf16.mxu0 0
      %266 = vmatpush1.bf16.msra.mxu0 0
      %267 = vmatprep.subr.bf16.mxu0 0
      %268 = vmatpush1.bf16.msra.mxu0 0
      %269 = vmatprep.subr.bf16.mxu0 0
      %270 = vmatpush1.bf16.msra.mxu0 0
      %271 = vmatprep.subr.bf16.mxu0 0
      %272 = vmatpush1.bf16.msra.mxu0 0
      %273 = vmatprep.subr.bf16.mxu0 0
      %274 = vmatpush1.bf16.msra.mxu0 0
      %275 = vmatprep.subr.bf16.mxu0 0
      %276 = vmatpush1.bf16.msra.mxu0 0
      %277 = vmatprep.subr.bf16.mxu0 0
      %278 = vmatpush1.bf16.msra.mxu0 0
      %279 = vmatprep.subr.bf16.mxu0 0
      %280 = vmatpush1.bf16.msra.mxu0 0
      %281 = vmatprep.subr.bf16.mxu0 0
      %282 = vmatpush1.bf16.msra.mxu0 0
      %283 = vmatprep.mubr.bf16.mxu0 0
      %284 = vmatmul.mubr.bf16.gmra.mrb[0].mxu0 %v242
      %v285 = vpop.f32.mrb[0].mxu0
      %v286 = vadd.f32 %v228, %v285
      %v287 = vpop.f32.mrb[0].mxu0
      %v288 = vadd.f32 %v228, %v287
      %v289 = vpop.f32.mrb[0].mxu0
      %v290 = vadd.f32 %v233, %v289
      %v291 = vpop.f32.mrb[0].mxu0
      %v292 = vadd.f32 %v233, %v291
      %293 = vdwg.mxu0
      %v294 = vmul.f32 %v286, 0.5
      %v295 = vmul.f32 %v288, 0.5
      %v296 = vmul.f32 %v290, 0.5
      %v297 = vmul.f32 %v292, 0.5
      %v298 = vmul.f32 %v286, %v286
      %v299 = vmul.f32 %v288, %v288
      %v300 = vmul.f32 %v290, %v290
      %v301 = vmul.f32 %v292, %v292
      %v302 = vmul.f32 %v298, %v286
      %v303 = vmul.f32 %v299, %v288
      %v304 = vmul.f32 %v300, %v290
      %v305 = vmul.f32 %v301, %v292
      %v306 = vmul.f32 %v302, 0.044715
      %v307 = vmul.f32 %v303, 0.044715
      %v308 = vmul.f32 %v304, 0.044715
      %v309 = vmul.f32 %v305, 0.044715
      %v310 = vadd.f32 %v286, %v306
      %v311 = vadd.f32 %v288, %v307
      %v312 = vadd.f32 %v290, %v308
      %v313 = vadd.f32 %v292, %v309
      %v314 = vmul.f32 %v310, 0.7978846
      %v315 = vmul.f32 %v311, 0.7978846
      %v316 = vmul.f32 %v312, 0.7978846
      %v317 = vmul.f32 %v313, 0.7978846
      %v318 = vtanh.pop %v314
      %v319 = vtanh.pop %v315
      %v320 = vtanh.pop %v316
      %v321 = vtanh.pop %v317
      %v322 = vadd.f32 %v318, 1.0
      %v323 = vadd.f32 %v319, 1.0
      %v324 = vadd.f32 %v320, 1.0
      %v325 = vadd.f32 %v321, 1.0
      %v326 = vmul.f32 %v294, %v322
      %v327 = vmul.f32 %v295, %v323
      %v328 = vmul.f32 %v296, %v324
      %v329 = vmul.f32 %v297, %v325
      %v330 = vpack.c.bf16 %v328, %v326
      %v331 = vpack.c.bf16 %v329, %v327
      %v334 = vunpack.c.l.b16 %v330
      %v335 = vunpack.c.l.b16 %v331
      %v336 = vunpack.c.h.b16 %v330
      %v337 = vunpack.c.h.b16 %v331
      %v338 = vpack.c.b16 %v335, %v334
      %v339 = vpack.c.b16 %v337, %v336
      %342 = vst [vmem:[%s208] sm:$0xff] %v338
      %343 = vst [vmem:[%s208 + $0x8] sm:$0x33] %v339
      %s344 = smul.u32 2, %s19
      %p345 = scmp.lt.s32.totalorder %s18, 1
      %s346 = scalar_select %p345, %s18, 1
      %p347 = scmp.lt.s32.totalorder %s344, 1
      %s348 = scalar_select %p347, %s344, 1
      %s349 = smul.addr %s346, 4
      %s350 = sadd.s32 %s348, %s349
      %s351 = smul.addr %s350, 4
      %s352 = scalar_lea.vmem %s3, %s351
      // Predicated region
      $region33: #{convs_out.3} parent=31 // pred_check
        %p353 = pneg %p116
      $region34: #{convs_out.3} parent=31 // pred_check_branch
        %355 = sbr.rel (%p353) target = $region36
      $region35: #{convs_out.3} parent=31 // pred_region
        %s356 = smul.u32 2, %s19
      $region36: #{convs_out.3} parent=31 // pred_fallthru
        _
    $region32: #{convs_out.3} parent=5 // pred_fallthru
      _
    %p357 = scmp.le.s32.totalorder 2, %s9
    // Predicated region
    $region37: #{convs_out.3} parent=5 // pred_check
      %p358 = pneg %p357
    $region38: #{convs_out.3} parent=5 // pred_check_branch
      %360 = sbr.rel (%p358) target = $region40
    $region39: #{convs_out.3} parent=5 // pred_region
      %s361 = ssub.s32 %s9, 2
      // Predicated region
      $region41: #{convs_out.3} parent=39 // pred_check
        %p362 = pneg %p122
      $region42: #{convs_out.3} parent=39 // pred_check_branch
        %364 = sbr.rel (%p362) target = $region44
      $region43: #{convs_out.3} parent=39 // pred_region
        %s365 = smul.u32 2, %s21
        %p366 = scmp.lt.s32.totalorder %s20, 1
        %s367 = scalar_select %p366, %s20, 1
        %p368 = scmp.lt.s32.totalorder %s365, 1
        %s369 = scalar_select %p368, %s365, 1
        %s370 = smul.addr %s367, 4
        %s371 = sadd.s32 %s369, %s370
        %s372 = smul.addr %s371, 4
        %s373 = scalar_lea.vmem %s3, %s372
      $region44: #{convs_out.3} parent=39 // pred_fallthru
        _
    $region40: #{convs_out.3} parent=5 // pred_fallthru
      _
  $region6: #{convs_out.3} parent=0 // loop_footer
    %s13 = sadd.s32 1, %s9
  $region7: #{convs_out.3} parent=0 // loop_footer_branch
    %8 = sbr.rel target = $region3
  $region8: #{convs_out.3} parent=0 // loop_exit
    _

// kernel: convs_out.4
$region0: #{convs_out.4}
  #allocation0 [shape = 'u32[]', space=smem, size = 0x4, offset = 0x4, fixed_abs, tag = 'smem constant byte address 0x4 - core index']
  #allocation1 [shape = 'u32[144,128]{1,0:T(1,128)}', space=vmem, size = 0x12000, scoped, tag = 'internal scratch']
  #allocation2 [shape = 'bf16[144,256]{1,0:T(16,128)(2,1)}', space=vmem, size = 0x12000, scoped, tag = 'scratch operand']
  %s0 = inlined_call_operand.vmem [shape: bf16[2,16,512], index: 0, kind: input, shape index: {}]
  %s1 = inlined_call_operand.vmem [shape: bf16[2,2,16,96], index: 1, kind: input, shape index: {}]
  %s2 = inlined_call_operand.vmem [shape: bf16[32,144], index: 2, kind: input, shape index: {}]
  %s3 = inlined_call_operand.vmem [shape: f32[32,1], index: 3, kind: input, shape index: {}]
  %s4 = inlined_call_operand.vmem [shape: bf16[2,32,512], index: 4, kind: output, shape index: {}]
  %s5 = sld [smem:[#allocation0]]
  $region121: #{convs_out.4} parent=0
    _
  %s7 = ssub.s32 1, %s5
  %s8 = scalar_select 0, %s7, %s5
  $region1: #{convs_out.4} parent=0
    #allocation3 [shape = 'u8[16384]{0}', space=vmem, size = 0x4000, scoped, tag = 'input window, operand 0']
    #allocation4 [shape = 'u8[32768]{0}', space=vmem, size = 0x8000, scoped, tag = 'output window, operand 0']
    loop: start=0, step=1, limit=6
    $region2: #{convs_out.4} parent=1 // loop_pre_header
      _
    $region3: #{convs_out.4} parent=1 // loop_header
      %s10 = sphi 0, %s14
      %p11 = scmp.ge.s32.totalorder %s10, 6
      %s17 = sphi 0, %s29
      %s18 = sphi 0, %s25
      %s19 = sphi 0, %s17
      %s20 = sphi 0, %s18
      %s21 = sphi 0, %s19
      %s22 = sphi 0, %s20
      %s34 = sphi 0, %s36
      %s37 = sphi 0, %s34
      %s38 = sphi 0, %s37
      %s54 = sphi 0, %s38
      %s62 = sphi 0, %s64
      %s65 = sphi 0, %s62
      %s66 = sphi 0, %s65
      %s82 = sphi 0, %s66
      %s86 = sphi 0, %s86
      %s88 = sphi 0, %s86
      %s89 = sphi 0, %s88
      %s103 = sphi 0, %s89
      %s107 = sphi 0, %s107
      %s109 = sphi 0, %s107
      %s110 = sphi 0, %s109
      %s124 = sphi 0, %s110
      %s132 = sphi 0, %s134
      %s135 = sphi 0, %s132
      %s136 = sphi 0, %s135
      %s152 = sphi 0, %s136
    $region4: #{convs_out.4} parent=1 // loop_header_branch
      %13 = sbr.rel (%p11) target = $region8
    $region5: #{convs_out.4} parent=1 // loop_body
      %s15 = ssub.s32 %s10, 1
      %s16 = ssub.s32 %s10, 2
      %s23 = sadd.s32 1, %s18
      %p24 = scmp.ge.s32.totalorder %s23, 2
      %s25 = scalar_select %p24, 0, %s23
      %s26 = sadd.s32 1, %s17
      %s27 = scalar_select %p24, %s26, %s17
      %p28 = scmp.ge.s32.totalorder %s27, 2
      %s29 = scalar_select %p28, 0, %s27
      %s30 = ssub.s32 %s17, %s29
      %s31 = ssub.s32 %s18, %s25
      %s32 = sor.u32 %s30, %s31
      %p33 = scmp.eq.s32.totalorder %s32, 0
      %s35 = sadd.s32 %s34, 1
      %s36 = scalar_select %p33, %s34, %s35
      %p39 = pneg %p33
      %p40 = scmp.eq.s32.totalorder %s10, 3
      %p41 = por %p39, %p40
      %p42 = scmp.ne.s32.totalorder %s34, %s37
      %p43 = scmp.eq.s32.totalorder %s10, 0
      %p44 = por %p42, %p43
      %p45 = scmp.ne.s32.totalorder %s34, %s37
      %p46 = scmp.eq.s32.totalorder %s15, 3
      %p47 = por %p45, %p46
      %p48 = scmp.ne.s32.totalorder %s37, %s38
      %p49 = scmp.eq.s32.totalorder %s15, 0
      %p50 = por %p48, %p49
      %p51 = scmp.ne.s32.totalorder %s37, %s38
      %p52 = scmp.eq.s32.totalorder %s16, 3
      %p53 = por %p51, %p52
      %p55 = scmp.ne.s32.totalorder %s38, %s54
      %p56 = scmp.eq.s32.totalorder %s16, 0
      %p57 = por %p55, %p56
      %s58 = ssub.s32 %s17, %s29
      %s59 = ssub.s32 %s18, %s25
      %s60 = sor.u32 %s58, %s59
      %p61 = scmp.eq.s32.totalorder %s60, 0
      %s63 = sadd.s32 %s62, 1
      %s64 = scalar_select %p61, %s62, %s63
      %p67 = pneg %p61
      %p68 = scmp.eq.s32.totalorder %s10, 3
      %p69 = por %p67, %p68
      %p70 = scmp.ne.s32.totalorder %s62, %s65
      %p71 = scmp.eq.s32.totalorder %s10, 0
      %p72 = por %p70, %p71
      %p73 = scmp.ne.s32.totalorder %s62, %s65
      %p74 = scmp.eq.s32.totalorder %s15, 3
      %p75 = por %p73, %p74
      %p76 = scmp.ne.s32.totalorder %s65, %s66
      %p77 = scmp.eq.s32.totalorder %s15, 0
      %p78 = por %p76, %p77
      %p79 = scmp.ne.s32.totalorder %s65, %s66
      %p80 = scmp.eq.s32.totalorder %s16, 3
      %p81 = por %p79, %p80
      %p83 = scmp.ne.s32.totalorder %s66, %s82
      %p84 = scmp.eq.s32.totalorder %s16, 0
      %p85 = por %p83, %p84
      %s87 = sadd.s32 %s86, 1
      %p90 = scmp.eq.s32.totalorder %s10, 3
      %p91 = scmp.ne.s32.totalorder %s86, %s88
      %p92 = scmp.eq.s32.totalorder %s10, 0
      %p93 = por %p91, %p92
      %p94 = scmp.ne.s32.totalorder %s86, %s88
      %p95 = scmp.eq.s32.totalorder %s15, 3
      %p96 = por %p94, %p95
      %p97 = scmp.ne.s32.totalorder %s88, %s89
      %p98 = scmp.eq.s32.totalorder %s15, 0
      %p99 = por %p97, %p98
      %p100 = scmp.ne.s32.totalorder %s88, %s89
      %p101 = scmp.eq.s32.totalorder %s16, 3
      %p102 = por %p100, %p101
      %p104 = scmp.ne.s32.totalorder %s89, %s103
      %p105 = scmp.eq.s32.totalorder %s16, 0
      %p106 = por %p104, %p105
      %s108 = sadd.s32 %s107, 1
      %p111 = scmp.eq.s32.totalorder %s10, 3
      %p112 = scmp.ne.s32.totalorder %s107, %s109
      %p113 = scmp.eq.s32.totalorder %s10, 0
      %p114 = por %p112, %p113
      %p115 = scmp.ne.s32.totalorder %s107, %s109
      %p116 = scmp.eq.s32.totalorder %s15, 3
      %p117 = por %p115, %p116
      %p118 = scmp.ne.s32.totalorder %s109, %s110
      %p119 = scmp.eq.s32.totalorder %s15, 0
      %p120 = por %p118, %p119
      %p121 = scmp.ne.s32.totalorder %s109, %s110
      %p122 = scmp.eq.s32.totalorder %s16, 3
      %p123 = por %p121, %p122
      %p125 = scmp.ne.s32.totalorder %s110, %s124
      %p126 = scmp.eq.s32.totalorder %s16, 0
      %p127 = por %p125, %p126
      %s128 = ssub.s32 %s17, %s29
      %s129 = ssub.s32 %s18, %s25
      %s130 = sor.u32 %s128, %s129
      %p131 = scmp.eq.s32.totalorder %s130, 0
      %s133 = sadd.s32 %s132, 1
      %s134 = scalar_select %p131, %s132, %s133
      %p137 = pneg %p131
      %p138 = scmp.eq.s32.totalorder %s10, 3
      %p139 = por %p137, %p138
      %p140 = scmp.ne.s32.totalorder %s132, %s135
      %p141 = scmp.eq.s32.totalorder %s10, 0
      %p142 = por %p140, %p141
      %p143 = scmp.ne.s32.totalorder %s132, %s135
      %p144 = scmp.eq.s32.totalorder %s15, 3
      %p145 = por %p143, %p144
      %p146 = scmp.ne.s32.totalorder %s135, %s136
      %p147 = scmp.eq.s32.totalorder %s15, 0
      %p148 = por %p146, %p147
      %p149 = scmp.ne.s32.totalorder %s135, %s136
      %p150 = scmp.eq.s32.totalorder %s16, 3
      %p151 = por %p149, %p150
      %p153 = scmp.ne.s32.totalorder %s136, %s152
      %p154 = scmp.eq.s32.totalorder %s16, 0
      %p155 = por %p153, %p154
      %p156 = scmp.le.s32.totalorder 1, %s10
      %p157 = scmp.lt.s32.totalorder %s10, 5
      %p158 = pnand %p156, %p157
      %p159 = pneg %p158
      // Predicated region
      $region9: #{convs_out.4} parent=5 // pred_check
        _
      $region10: #{convs_out.4} parent=5 // pred_check_branch
        %161 = sbr.rel (%p158) target = $region12
      $region11: #{convs_out.4} parent=5 // pred_region
        %s162 = ssub.s32 %s10, 1
        // Predicated region
        $region13: #{convs_out.4} parent=11 // pred_check
          %p163 = pneg %p99
        $region14: #{convs_out.4} parent=11 // pred_check_branch
          %165 = sbr.rel (%p163) target = $region16
        $region15: #{convs_out.4} parent=11 // pred_region
          _
        $region16: #{convs_out.4} parent=11 // pred_fallthru
          _
        // Predicated region
        $region17: #{convs_out.4} parent=11 // pred_check
          %p166 = pneg %p120
        $region18: #{convs_out.4} parent=11 // pred_check_branch
          %168 = sbr.rel (%p166) target = $region20
        $region19: #{convs_out.4} parent=11 // pred_region
          _
        $region20: #{convs_out.4} parent=11 // pred_fallthru
          _
      $region12: #{convs_out.4} parent=5 // pred_fallthru
        _
      %p169 = scmp.lt.s32.totalorder %s10, 4
      // Predicated region
      $region21: #{convs_out.4} parent=5 // pred_check
        %p170 = pneg %p169
      $region22: #{convs_out.4} parent=5 // pred_check_branch
        %172 = sbr.rel (%p170) target = $region24
      $region23: #{convs_out.4} parent=5 // pred_region
        // Predicated region
        $region25: #{convs_out.4} parent=23 // pred_check
          %p173 = pneg %p44
        $region26: #{convs_out.4} parent=23 // pred_check_branch
          %175 = sbr.rel (%p173) target = $region28
        $region27: #{convs_out.4} parent=23 // pred_region
          %s176 = sand.u32 %s34, 1
          %s177 = sand.u32 %s34, 1
          %s178 = smul.addr %s177, 16
          %s179 = scalar_lea.vmem [#allocation3], %s178
          %s180 = smul.u32 2, %s18
          %s181 = smul.addr %s17, 8
          %s182 = sadd.s32 %s180, %s181
          %s183 = smul.addr %s182, 4
          %s184 = scalar_lea.vmem %s0, %s183
          // Predicated region
          $region29: #{convs_out.4} parent=27 // pred_check
            _
          $region30: #{convs_out.4} parent=27 // pred_check_branch
            %186 = sbr.rel (0) target = $region32
          $region31: #{convs_out.4} parent=27 // pred_region
            // Predicated region
            $region33: #{convs_out.4} parent=31 // pred_check
              _
            $region34: #{convs_out.4} parent=31 // pred_check_branch
              %188 = sbr.rel (0) target = $region36
            $region35: #{convs_out.4} parent=31 // pred_region
              // Predicated region
              $region48: #{convs_out.4} parent=35 // pred_check
                _
              $region49: #{convs_out.4} parent=35 // pred_check_branch
                %205 = sbr.rel (0) target = $region51
              $region50: #{convs_out.4} parent=35 // pred_region
                loop: start=0, step=1, limit=1
                $region52: #{convs_out.4} parent=50 // loop_pre_header
                  _
                $region53: #{convs_out.4} parent=50 // loop_header
                  %s207 = sphi 0, %s211
                  %p208 = scmp.ge.s32.totalorder %s207, 1
                  %s212 = sphi %s184, %s184
                  %s213 = sphi %s179, %s179
                $region54: #{convs_out.4} parent=50 // loop_header_branch
                  %210 = sbr.rel (%p208) target = $region58
                $region55: #{convs_out.4} parent=50 // loop_body
                  %v214 = vld [vmem:[%s212] sm:$0xff]
                  %215 = vst [vmem:[%s213] sm:$0xff] %v214
                  %v216 = vld [vmem:[%s212 + $0x10] sm:$0xff]
                  %217 = vst [vmem:[%s213 + $0x8] sm:$0xff] %v216
                $region56: #{convs_out.4} parent=50 // loop_footer
                  %s211 = sadd.s32 1, %s207
                $region57: #{convs_out.4} parent=50 // loop_footer_branch
                  %206 = sbr.rel target = $region53
                $region58: #{convs_out.4} parent=50 // loop_exit
                  _
              $region51: #{convs_out.4} parent=35 // pred_fallthru
                _
              // Predicated region
              $region59: #{convs_out.4} parent=35 // pred_check
                _
              $region60: #{convs_out.4} parent=35 // pred_check_branch
                %219 = sbr.rel target = $region62
              $region61: #{convs_out.4} parent=35 // pred_region
                _
              $region62: #{convs_out.4} parent=35 // pred_fallthru
                _
            $region36: #{convs_out.4} parent=31 // pred_fallthru
              _
            // Predicated region
            $region37: #{convs_out.4} parent=31 // pred_check
              _
            $region38: #{convs_out.4} parent=31 // pred_check_branch
              %190 = sbr.rel target = $region40
            $region39: #{convs_out.4} parent=31 // pred_region
              loop: start=0, step=1, limit=1
              $region41: #{convs_out.4} parent=39 // loop_pre_header
                _
              $region42: #{convs_out.4} parent=39 // loop_header
                %s193 = sphi 0, %s197
                %p194 = scmp.ge.s32.totalorder %s193, 1
                %s198 = sphi %s184, %s184
                %s199 = sphi %s179, %s179
              $region43: #{convs_out.4} parent=39 // loop_header_branch
                %196 = sbr.rel (%p194) target = $region47
              $region44: #{convs_out.4} parent=39 // loop_body
                %v200 = vld [vmem:[%s198] sm:$0xff]
                %201 = vst [vmem:[%s199] sm:$0xff] %v200
                %v202 = vld [vmem:[%s198 + $0x10] sm:$0xff]
                %203 = vst [vmem:[%s199 + $0x8] sm:$0xff] %v202
              $region45: #{convs_out.4} parent=39 // loop_footer
                %s197 = sadd.s32 1, %s193
              $region46: #{convs_out.4} parent=39 // loop_footer_branch
                %192 = sbr.rel target = $region42
              $region47: #{convs_out.4} parent=39 // loop_exit
                _
            $region40: #{convs_out.4} parent=31 // pred_fallthru
              _
          $region32: #{convs_out.4} parent=27 // pred_fallthru
            _
          %220 = vnop
        $region28: #{convs_out.4} parent=23 // pred_fallthru
          _
        // Predicated region
        $region63: #{convs_out.4} parent=23 // pred_check
          %p221 = pneg %p72
        $region64: #{convs_out.4} parent=23 // pred_check_branch
          %223 = sbr.rel (%p221) target = $region66
        $region65: #{convs_out.4} parent=23 // pred_region
          %p224 = scmp.lt.s32.totalorder %s17, 1
          %s225 = scalar_select %p224, %s17, 1
          %p226 = scmp.lt.s32.totalorder %s18, 1
          %s227 = scalar_select %p226, %s18, 1
          %s228 = smul.addr %s227, 2
          %s229 = smul.addr %s225, 4
          %s230 = sadd.s32 %s228, %s229
          %s231 = smul.addr %s230, 4
          %s232 = scalar_lea.vmem %s1, %s231
        $region66: #{convs_out.4} parent=23 // pred_fallthru
          _
      $region24: #{convs_out.4} parent=5 // pred_fallthru
        _
      %p233 = scmp.le.s32.totalorder 1, %s10
      %p234 = scmp.lt.s32.totalorder %s10, 5
      %p235 = pnand %p233, %p234
      %p236 = pneg %p235
      // Predicated region
      $region67: #{convs_out.4} parent=5 // pred_check
        _
      $region68: #{convs_out.4} parent=5 // pred_check_branch
        %238 = sbr.rel (%p235) target = $region70
      $region69: #{convs_out.4} parent=5 // pred_region
        %s239 = ssub.s32 %s10, 1
        %s240 = sand.u32 %s37, 1
        %s241 = sand.u32 %s37, 1
        %s242 = smul.addr %s241, 16
        %s243 = scalar_lea.vmem [#allocation3], %s242
        // Predicated region
        $region71: #{convs_out.4} parent=69 // pred_check
          %p244 = pneg %p50
        $region72: #{convs_out.4} parent=69 // pred_check_branch
          %246 = sbr.rel (%p244) target = $region74
        $region73: #{convs_out.4} parent=69 // pred_region
          _
        $region74: #{convs_out.4} parent=69 // pred_fallthru
          _
        %s247 = sand.u32 %s37, 1
        %s248 = sand.u32 %s37, 1
        %s249 = smul.addr %s248, 16
        %s250 = scalar_lea.vmem [#allocation3], %s249
        %p251 = pneg %p50
        %p252 = pneg %p47
        %p253 = scmp.lt.s32.totalorder %s19, 1
        %s254 = scalar_select %p253, %s19, 1
        %p255 = scmp.lt.s32.totalorder %s20, 1
        %s256 = scalar_select %p255, %s20, 1
        %s257 = smul.addr %s256, 2
        %s258 = smul.addr %s254, 4
        %s259 = sadd.s32 %s257, %s258
        %s260 = smul.addr %s259, 4
        %s261 = scalar_lea.vmem %s1, %s260
        %p262 = pneg %p78
        %p263 = pneg %p75
        %p264 = pneg %p99
        %p265 = pneg %p96
        %p266 = pneg %p120
        %p267 = pneg %p117
        %p268 = pneg %p148
        %p269 = pneg %p145
        %s270 = sand.u32 %s135, 1
        %s271 = sand.u32 %s135, 1
        %s272 = smul.addr %s271, 32
        %s273 = scalar_lea.vmem [#allocation4], %s272
        %s274 = smul.u32 2, %s20
        %p275 = scmp.lt.s32.totalorder %s19, 1
        %s276 = scalar_select %p275, %s19, 1
        %p277 = scmp.lt.s32.totalorder %s20, 1
        %s278 = scalar_select %p277, %s20, 1
        %s279 = smul.addr %s278, 2
        %s280 = smul.addr %s276, 4
        %s281 = sadd.s32 %s279, %s280
        %s282 = smul.addr %s281, 4
        %s283 = scalar_lea.vmem %s1, %s282
        %s284 = smul.u32 2, %s20
        %v286 = vld [vmem:[%s243] sm:$0xff]
        %v287 = vld [vmem:[%s243 + $0x8] sm:$0xff]
        %v288 = vld [vmem:[%s283] sm:$0xf]
        %v289 = vld [vmem:[%s283 + $0x4] sm:$0xf]
        %v292 = vunpack.c.l.b16 %v286
        %v293 = vunpack.c.h.b16 %v286
        %v294 = vunpack.c.l.b16 %v287
        %v295 = vunpack.c.h.b16 %v287
        %v296 = vpack.c.b16 %v294, %v292
        %v297 = vpack.c.b16 %v295, %v293
        %v302 = vunpack.c.l.b16 %v288
        %v303 = vunpack.c.l.b16 %v289
        %v304 = vpack.c.b16 %v303, %v302
        %305 = vst [vmem:[#allocation2] sm:$0xff] %v296
        %306 = vst [vmem:[#allocation2 + $0x8] sm:$0xff] %v297
        %307 = vrot.lane.b32.xlu0 %v296, 127
        %v308 = vpop.permute.xlu0 %307
        %309 = vrot.lane.b32.xlu0 %v297, 127
        %v310 = vpop.permute.xlu0 %309
        %311 = vrot.lane.b32.xlu0 %v304, 127
        %v312 = vpop.permute.xlu0 %311
        %vm313 = vcmask 1039360
        %v314 = vsel %vm313, %v308, %v310
        %v315 = vsel %vm313, %v310, %v312
        %318 = vst [vmem:[#allocation2 + $0x10] sm:$0xff] %v314
        %319 = vst [vmem:[#allocation2 + $0x18] sm:$0xff] %v315
        %320 = vrot.lane.b32.xlu0 %v296, 126
        %v321 = vpop.permute.xlu0 %320
        %322 = vrot.lane.b32.xlu0 %v297, 126
        %v323 = vpop.permute.xlu0 %322
        %324 = vrot.lane.b32.xlu0 %v304, 126
        %v325 = vpop.permute.xlu0 %324
        %vm326 = vcmask 1031168
        %v327 = vsel %vm326, %v321, %v323
        %v328 = vsel %vm326, %v323, %v325
        %331 = vst [vmem:[#allocation2 + $0x20] sm:$0xff] %v327
        %332 = vst [vmem:[#allocation2 + $0x28] sm:$0xff] %v328
        %333 = vrot.lane.b32.xlu0 %v296, 96
        %v334 = vpop.permute.xlu0 %333
        %335 = vrot.lane.b32.xlu0 %v297, 96
        %v336 = vpop.permute.xlu0 %335
        %337 = vrot.lane.b32.xlu0 %v304, 96
        %v338 = vpop.permute.xlu0 %337
        %vm339 = vcmask 785408
        %v340 = vsel %vm339, %v334, %v336
        %v341 = vsel %vm339, %v336, %v338
        %344 = vst [vmem:[#allocation2 + $0x30] sm:$0xff] %v340
        %345 = vst [vmem:[#allocation2 + $0x38] sm:$0xff] %v341
        %346 = vrot.lane.b32.xlu0 %v296, 95
        %v347 = vpop.permute.xlu0 %346
        %348 = vrot.lane.b32.xlu0 %v297, 95
        %v349 = vpop.permute.xlu0 %348
        %350 = vrot.lane.b32.xlu0 %v304, 95
        %v351 = vpop.permute.xlu0 %350
        %vm352 = vcmask 777216
        %v353 = vsel %vm352, %v347, %v349
        %v354 = vsel %vm352, %v349, %v351
        %357 = vst [vmem:[#allocation2 + $0x40] sm:$0xff] %v353
        %358 = vst [vmem:[#allocation2 + $0x48] sm:$0xff] %v354
        %359 = vrot.lane.b32.xlu0 %v296, 94
        %v360 = vpop.permute.xlu0 %359
        %361 = vrot.lane.b32.xlu0 %v297, 94
        %v362 = vpop.permute.xlu0 %361
        %363 = vrot.lane.b32.xlu0 %v304, 94
        %v364 = vpop.permute.xlu0 %363
        %vm365 = vcmask 769024
        %v366 = vsel %vm365, %v360, %v362
        %v367 = vsel %vm365, %v362, %v364
        %370 = vst [vmem:[#allocation2 + $0x50] sm:$0xff] %v366
        %371 = vst [vmem:[#allocation2 + $0x58] sm:$0xff] %v367
        %372 = vrot.lane.b32.xlu0 %v296, 64
        %v373 = vpop.permute.xlu0 %372
        %374 = vrot.lane.b32.xlu0 %v297, 64
        %v375 = vpop.permute.xlu0 %374
        %376 = vrot.lane.b32.xlu0 %v304, 64
        %v377 = vpop.permute.xlu0 %376
        %vm378 = vcmask 523264
        %v379 = vsel %vm378, %v373, %v375
        %v380 = vsel %vm378, %v375, %v377
        %383 = vst [vmem:[#allocation2 + $0x60] sm:$0xff] %v379
        %384 = vst [vmem:[#allocation2 + $0x68] sm:$0xff] %v380
        %385 = vrot.lane.b32.xlu0 %v296, 63
        %v386 = vpop.permute.xlu0 %385
        %387 = vrot.lane.b32.xlu0 %v297, 63
        %v388 = vpop.permute.xlu0 %387
        %389 = vrot.lane.b32.xlu0 %v304, 63
        %v390 = vpop.permute.xlu0 %389
        %vm391 = vcmask 515072
        %v392 = vsel %vm391, %v386, %v388
        %v393 = vsel %vm391, %v388, %v390
        %396 = vst [vmem:[#allocation2 + $0x70] sm:$0xff] %v392
        %397 = vst [vmem:[#allocation2 + $0x78] sm:$0xff] %v393
        %398 = vrot.lane.b32.xlu0 %v296, 62
        %v399 = vpop.permute.xlu0 %398
        %400 = vrot.lane.b32.xlu0 %v297, 62
        %v401 = vpop.permute.xlu0 %400
        %402 = vrot.lane.b32.xlu0 %v304, 62
        %v403 = vpop.permute.xlu0 %402
        %vm404 = vcmask 506880
        %v405 = vsel %vm404, %v399, %v401
        %v406 = vsel %vm404, %v401, %v403
        %409 = vst [vmem:[#allocation2 + $0x80] sm:$0xff] %v405
        %410 = vst [vmem:[#allocation2 + $0x88] sm:$0xff] %v406
        %v411 = vld [vmem:[%s2] sm:$0xff]
        %v412 = vld [vmem:[%s2 + $0x8] sm:$0xff]
        %v413 = vld [vmem:[%s2 + $0x10] sm:$0xff]
        %v414 = vld [vmem:[%s2 + $0x18] sm:$0xff]
        %v415 = vld [vmem:[#allocation2] sm:$0xff]
        %v416 = vld [vmem:[#allocation2 + $0x8] sm:$0xff]
        %v417 = vld [vmem:[#allocation2 + $0x10] sm:$0xff]
        %v418 = vld [vmem:[#allocation2 + $0x18] sm:$0xff]
        %v419 = vld [vmem:[#allocation2 + $0x20] sm:$0xff]
        %v420 = vld [vmem:[#allocation2 + $0x28] sm:$0xff]
        %v421 = vld [vmem:[#allocation2 + $0x30] sm:$0xff]
        %v422 = vld [vmem:[#allocation2 + $0x38] sm:$0xff]
        %v423 = vld [vmem:[#allocation2 + $0x40] sm:$0xff]
        %v424 = vld [vmem:[#allocation2 + $0x48] sm:$0xff]
        %v425 = vld [vmem:[#allocation2 + $0x50] sm:$0xff]
        %v426 = vld [vmem:[#allocation2 + $0x58] sm:$0xff]
        %v427 = vld [vmem:[#allocation2 + $0x60] sm:$0xff]
        %v428 = vld [vmem:[#allocation2 + $0x68] sm:$0xff]
        %v429 = vld [vmem:[#allocation2 + $0x70] sm:$0xff]
        %v430 = vld [vmem:[#allocation2 + $0x78] sm:$0xff]
        %v431 = vld [vmem:[#allocation2 + $0x80] sm:$0xff]
        %v432 = vld [vmem:[#allocation2 + $0x88] sm:$0xff]
        %v433 = vld [vmem:[%s3] sm:$0xff]
        %v434 = vld [vmem:[%s3 + $0x8] sm:$0xff]
        %v435 = vld [vmem:[%s3 + $0x10] sm:$0xff]
        %v436 = vld [vmem:[%s3 + $0x18] sm:$0xff]
        %438 = vset.pattern.permute.xlu0 0
        %439 = vperm.xlu0 %438, %v433
        %v440 = vpop.permute.xlu0 %439
        %443 = vset.pattern.permute.xlu0 0
        %444 = vperm.xlu0 %443, %v434
        %v445 = vpop.permute.xlu0 %444
        %448 = vset.pattern.permute.xlu0 0
        %449 = vperm.xlu0 %448, %v435
        %v450 = vpop.permute.xlu0 %449
        %453 = vset.pattern.permute.xlu0 0
        %454 = vperm.xlu0 %453, %v436
        %v455 = vpop.permute.xlu0 %454
        %v461 = vunpack.c.l.b16 %v411
        %v462 = vunpack.c.h.b16 %v411
        %v463 = vunpack.c.l.b16 %v412
        %v464 = vunpack.c.h.b16 %v412
        %v465 = vunpack.c.l.b16 %v413
        %v466 = vunpack.c.h.b16 %v413
        %v467 = vunpack.c.l.b16 %v414
        %v468 = vunpack.c.h.b16 %v414
        %v469 = vpack.c.b16 %v463, %v461
        %v470 = vpack.c.b16 %v464, %v462
        %v471 = vpack.c.b16 %v467, %v465
        %v472 = vpack.c.b16 %v468, %v466
        %vm475 = vcmask 130048
        %v477 = vsel %vm475, %v470, 0
        %v480 = vsel %vm475, %v472, 0
        %482 = vmatprep.subr.bf16.mxu0 %v416
        %483 = vmatpush1.bf16.msra.mxu0 %v415
        %484 = vmatprep.subr.bf16.mxu0 %v418
        %485 = vmatpush1.bf16.msra.mxu0 %v417
        %486 = vmatprep.subr.bf16.mxu0 %v420
        %487 = vmatpush1.bf16.msra.mxu0 %v419
        %488 = vmatprep.subr.bf16.mxu0 %v422
        %489 = vmatpush1.bf16.msra.mxu0 %v421
        %490 = vmatprep.subr.bf16.mxu0 %v424
        %491 = vmatpush1.bf16.msra.mxu0 %v423
        %492 = vmatprep.subr.bf16.mxu0 %v426
        %493 = vmatpush1.bf16.msra.mxu0 %v425
        %494 = vmatprep.subr.bf16.mxu0 %v428
        %495 = vmatpush1.bf16.msra.mxu0 %v427
        %496 = vmatprep.subr.bf16.mxu0 %v430
        %497 = vmatpush1.bf16.msra.mxu0 %v429
        %498 = vmatprep.subr.bf16.mxu0 %v432
        %499 = vmatpush1.bf16.msra.mxu0 %v431
        %500 = vmatprep.subr.bf16.mxu0 0
        %501 = vmatpush1.bf16.msra.mxu0 0
        %502 = vmatprep.subr.bf16.mxu0 0
        %503 = vmatpush1.bf16.msra.mxu0 0
        %504 = vmatprep.subr.bf16.mxu0 0
        %505 = vmatpush1.bf16.msra.mxu0 0
        %506 = vmatprep.subr.bf16.mxu0 0
        %507 = vmatpush1.bf16.msra.mxu0 0
        %508 = vmatprep.subr.bf16.mxu0 0
        %509 = vmatpush1.bf16.msra.mxu0 0
        %510 = vmatprep.subr.bf16.mxu0 0
        %511 = vmatpush1.bf16.msra.mxu0 0
        %512 = vmatprep.subr.bf16.mxu0 0
        %513 = vmatpush1.bf16.msra.mxu0 0
        %514 = vmatprep.mubr.bf16.mxu0 %v477
        %515 = vmatmul.mubr.bf16.gmra.mrb[0].mxu0 %v469
        %v516 = vpop.f32.mrb[0].mxu0
        %v517 = vadd.f32 %v440, %v516
        %v518 = vpop.f32.mrb[0].mxu0
        %v519 = vadd.f32 %v440, %v518
        %v520 = vpop.f32.mrb[0].mxu0
        %v521 = vadd.f32 %v445, %v520
        %v522 = vpop.f32.mrb[0].mxu0
        %v523 = vadd.f32 %v445, %v522
        %524 = vmatprep.mubr.bf16.mxu0 %v480
        %525 = vmatmul.mubr.bf16.gmra.mrb[0].mxu0 %v471
        %v526 = vpop.f32.mrb[0].mxu0
        %v527 = vadd.f32 %v450, %v526
        %v528 = vpop.f32.mrb[0].mxu0
        %v529 = vadd.f32 %v450, %v528
        %v530 = vpop.f32.mrb[0].mxu0
        %v531 = vadd.f32 %v455, %v530
        %v532 = vpop.f32.mrb[0].mxu0
        %v533 = vadd.f32 %v455, %v532
        %534 = vdwg.mxu0
        %v535 = vmul.f32 %v517, 0.5
        %v536 = vmul.f32 %v519, 0.5
        %v537 = vmul.f32 %v521, 0.5
        %v538 = vmul.f32 %v523, 0.5
        %v539 = vmul.f32 %v527, 0.5
        %v540 = vmul.f32 %v529, 0.5
        %v541 = vmul.f32 %v531, 0.5
        %v542 = vmul.f32 %v533, 0.5
        %v543 = vmul.f32 %v517, %v517
        %v544 = vmul.f32 %v519, %v519
        %v545 = vmul.f32 %v521, %v521
        %v546 = vmul.f32 %v523, %v523
        %v547 = vmul.f32 %v527, %v527
        %v548 = vmul.f32 %v529, %v529
        %v549 = vmul.f32 %v531, %v531
        %v550 = vmul.f32 %v533, %v533
        %v551 = vmul.f32 %v543, %v517
        %v552 = vmul.f32 %v544, %v519
        %v553 = vmul.f32 %v545, %v521
        %v554 = vmul.f32 %v546, %v523
        %v555 = vmul.f32 %v547, %v527
        %v556 = vmul.f32 %v548, %v529
        %v557 = vmul.f32 %v549, %v531
        %v558 = vmul.f32 %v550, %v533
        %v559 = vmul.f32 %v551, 0.044715
        %v560 = vmul.f32 %v552, 0.044715
        %v561 = vmul.f32 %v553, 0.044715
        %v562 = vmul.f32 %v554, 0.044715
        %v563 = vmul.f32 %v555, 0.044715
        %v564 = vmul.f32 %v556, 0.044715
        %v565 = vmul.f32 %v557, 0.044715
        %v566 = vmul.f32 %v558, 0.044715
        %v567 = vadd.f32 %v517, %v559
        %v568 = vadd.f32 %v519, %v560
        %v569 = vadd.f32 %v521, %v561
        %v570 = vadd.f32 %v523, %v562
        %v571 = vadd.f32 %v527, %v563
        %v572 = vadd.f32 %v529, %v564
        %v573 = vadd.f32 %v531, %v565
        %v574 = vadd.f32 %v533, %v566
        %v575 = vmul.f32 %v567, 0.7978846
        %v576 = vmul.f32 %v568, 0.7978846
        %v577 = vmul.f32 %v569, 0.7978846
        %v578 = vmul.f32 %v570, 0.7978846
        %v579 = vmul.f32 %v571, 0.7978846
        %v580 = vmul.f32 %v572, 0.7978846
        %v581 = vmul.f32 %v573, 0.7978846
        %v582 = vmul.f32 %v574, 0.7978846
        %v583 = vtanh.pop %v575
        %v584 = vtanh.pop %v576
        %v585 = vtanh.pop %v577
        %v586 = vtanh.pop %v578
        %v587 = vtanh.pop %v579
        %v588 = vtanh.pop %v580
        %v589 = vtanh.pop %v581
        %v590 = vtanh.pop %v582
        %v591 = vadd.f32 %v583, 1.0
        %v592 = vadd.f32 %v584, 1.0
        %v593 = vadd.f32 %v585, 1.0
        %v594 = vadd.f32 %v586, 1.0
        %v595 = vadd.f32 %v587, 1.0
        %v596 = vadd.f32 %v588, 1.0
        %v597 = vadd.f32 %v589, 1.0
        %v598 = vadd.f32 %v590, 1.0
        %v599 = vmul.f32 %v535, %v591
        %v600 = vmul.f32 %v536, %v592
        %v601 = vmul.f32 %v537, %v593
        %v602 = vmul.f32 %v538, %v594
        %v603 = vmul.f32 %v539, %v595
        %v604 = vmul.f32 %v540, %v596
        %v605 = vmul.f32 %v541, %v597
        %v606 = vmul.f32 %v542, %v598
        %v607 = vpack.c.bf16 %v601, %v599
        %v608 = vpack.c.bf16 %v602, %v600
        %v609 = vpack.c.bf16 %v605, %v603
        %v610 = vpack.c.bf16 %v606, %v604
        %v615 = vunpack.c.l.b16 %v607
        %v616 = vunpack.c.l.b16 %v608
        %v617 = vunpack.c.h.b16 %v607
        %v618 = vunpack.c.h.b16 %v608
        %v619 = vunpack.c.l.b16 %v609
        %v620 = vunpack.c.l.b16 %v610
        %v621 = vunpack.c.h.b16 %v609
        %v622 = vunpack.c.h.b16 %v610
        %v623 = vpack.c.b16 %v616, %v615
        %v624 = vpack.c.b16 %v618, %v617
        %v625 = vpack.c.b16 %v620, %v619
        %v626 = vpack.c.b16 %v622, %v621
        %631 = vst [vmem:[%s273] sm:$0xff] %v623
        %632 = vst [vmem:[%s273 + $0x8] sm:$0xff] %v624
        %633 = vst [vmem:[%s273 + $0x10] sm:$0xff] %v625
        %634 = vst [vmem:[%s273 + $0x18] sm:$0xff] %v626
        %s635 = sand.u32 %s135, 1
        %s636 = sand.u32 %s135, 1
        %s637 = smul.addr %s636, 32
        %s638 = scalar_lea.vmem [#allocation4], %s637
        // Predicated region
        $region75: #{convs_out.4} parent=69 // pred_check
          %p639 = pneg %p145
        $region76: #{convs_out.4} parent=69 // pred_check_branch
          %641 = sbr.rel (%p639) target = $region78
        $region77: #{convs_out.4} parent=69 // pred_region
          %s642 = smul.u32 2, %s20
          %s643 = smul.addr %s19, 16
          %s644 = sadd.s32 %s642, %s643
          %s645 = smul.addr %s644, 4
          %s646 = scalar_lea.vmem %s4, %s645
          // Predicated region
          $region79: #{convs_out.4} parent=77 // pred_check
            _
          $region80: #{convs_out.4} parent=77 // pred_check_branch
            %648 = sbr.rel (0) target = $region82
          $region81: #{convs_out.4} parent=77 // pred_region
            // Predicated region
            $region83: #{convs_out.4} parent=81 // pred_check
              _
            $region84: #{convs_out.4} parent=81 // pred_check_branch
              %650 = sbr.rel (0) target = $region86
            $region85: #{convs_out.4} parent=81 // pred_region
              // Predicated region
              $region98: #{convs_out.4} parent=85 // pred_check
                _
              $region99: #{convs_out.4} parent=85 // pred_check_branch
                %671 = sbr.rel (0) target = $region101
              $region100: #{convs_out.4} parent=85 // pred_region
                loop: start=0, step=1, limit=1
                $region102: #{convs_out.4} parent=100 // loop_pre_header
                  _
                $region103: #{convs_out.4} parent=100 // loop_header
                  %s673 = sphi 0, %s677
                  %p674 = scmp.ge.s32.totalorder %s673, 1
                  %s678 = sphi %s638, %s638
                  %s679 = sphi %s646, %s646
                $region104: #{convs_out.4} parent=100 // loop_header_branch
                  %676 = sbr.rel (%p674) target = $region108
                $region105: #{convs_out.4} parent=100 // loop_body
                  %v680 = vld [vmem:[%s678] sm:$0xff]
                  %681 = vst [vmem:[%s679] sm:$0xff] %v680
                  %v682 = vld [vmem:[%s678 + $0x8] sm:$0xff]
                  %683 = vst [vmem:[%s679 + $0x10] sm:$0xff] %v682
                  %v684 = vld [vmem:[%s678 + $0x10] sm:$0xff]
                  %685 = vst [vmem:[%s679 + $0x20] sm:$0xff] %v684
                  %v686 = vld [vmem:[%s678 + $0x18] sm:$0xff]
                  %687 = vst [vmem:[%s679 + $0x30] sm:$0xff] %v686
                $region106: #{convs_out.4} parent=100 // loop_footer
                  %s677 = sadd.s32 1, %s673
                $region107: #{convs_out.4} parent=100 // loop_footer_branch
                  %672 = sbr.rel target = $region103
                $region108: #{convs_out.4} parent=100 // loop_exit
                  _
              $region101: #{convs_out.4} parent=85 // pred_fallthru
                _
              // Predicated region
              $region109: #{convs_out.4} parent=85 // pred_check
                _
              $region110: #{convs_out.4} parent=85 // pred_check_branch
                %689 = sbr.rel target = $region112
              $region111: #{convs_out.4} parent=85 // pred_region
                _
              $region112: #{convs_out.4} parent=85 // pred_fallthru
                _
            $region86: #{convs_out.4} parent=81 // pred_fallthru
              _
            // Predicated region
            $region87: #{convs_out.4} parent=81 // pred_check
              _
            $region88: #{convs_out.4} parent=81 // pred_check_branch
              %652 = sbr.rel target = $region90
            $region89: #{convs_out.4} parent=81 // pred_region
              loop: start=0, step=1, limit=1
              $region91: #{convs_out.4} parent=89 // loop_pre_header
                _
              $region92: #{convs_out.4} parent=89 // loop_header
                %s655 = sphi 0, %s659
                %p656 = scmp.ge.s32.totalorder %s655, 1
                %s660 = sphi %s638, %s638
                %s661 = sphi %s646, %s646
              $region93: #{convs_out.4} parent=89 // loop_header_branch
                %658 = sbr.rel (%p656) target = $region97
              $region94: #{convs_out.4} parent=89 // loop_body
                %v662 = vld [vmem:[%s660] sm:$0xff]
                %663 = vst [vmem:[%s661] sm:$0xff] %v662
                %v664 = vld [vmem:[%s660 + $0x8] sm:$0xff]
                %665 = vst [vmem:[%s661 + $0x10] sm:$0xff] %v664
                %v666 = vld [vmem:[%s660 + $0x10] sm:$0xff]
                %667 = vst [vmem:[%s661 + $0x20] sm:$0xff] %v666
                %v668 = vld [vmem:[%s660 + $0x18] sm:$0xff]
                %669 = vst [vmem:[%s661 + $0x30] sm:$0xff] %v668
              $region95: #{convs_out.4} parent=89 // loop_footer
                %s659 = sadd.s32 1, %s655
              $region96: #{convs_out.4} parent=89 // loop_footer_branch
                %654 = sbr.rel target = $region92
              $region97: #{convs_out.4} parent=89 // loop_exit
                _
            $region90: #{convs_out.4} parent=81 // pred_fallthru
              _
          $region82: #{convs_out.4} parent=77 // pred_fallthru
            _
          %690 = vnop
        $region78: #{convs_out.4} parent=69 // pred_fallthru
          _
      $region70: #{convs_out.4} parent=5 // pred_fallthru
        _
      %p691 = scmp.le.s32.totalorder 2, %s10
      // Predicated region
      $region113: #{convs_out.4} parent=5 // pred_check
        %p692 = pneg %p691
      $region114: #{convs_out.4} parent=5 // pred_check_branch
        %694 = sbr.rel (%p692) target = $region116
      $region115: #{convs_out.4} parent=5 // pred_region
        %s695 = ssub.s32 %s10, 2
        // Predicated region
        $region117: #{convs_out.4} parent=115 // pred_check
          %p696 = pneg %p151
        $region118: #{convs_out.4} parent=115 // pred_check_branch
          %698 = sbr.rel (%p696) target = $region120
        $region119: #{convs_out.4} parent=115 // pred_region
          %s699 = sand.u32 %s136, 1
          %s700 = sand.u32 %s136, 1
          %s701 = smul.addr %s700, 32
          %s702 = scalar_lea.vmem [#allocation4], %s701
        $region120: #{convs_out.4} parent=115 // pred_fallthru
          _
      $region116: #{convs_out.4} parent=5 // pred_fallthru
        _
    $region6: #{convs_out.4} parent=1 // loop_footer
      %s14 = sadd.s32 1, %s10
    $region7: #{convs_out.4} parent=1 // loop_footer_branch
      %9 = sbr.rel target = $region3
    $region8: #{convs_out.4} parent=1 // loop_exit
      _

// kernel: convs_out.5
$region0: #{convs_out.5}
  #allocation0 [shape = 'u32[]', space=smem, size = 0x4, offset = 0x4, fixed_abs, tag = 'smem constant byte address 0x4 - core index']
  #allocation1 [shape = 'u32[144,128]{1,0:T(1,128)}', space=vmem, size = 0x12000, scoped, tag = 'internal scratch']
  #allocation2 [shape = 'bf16[72,640]{1,0:T(8,128)(2,1)}', space=vmem, size = 0x16800, scoped, tag = 'scratch operand']
  %s0 = inlined_call_operand.vmem [shape: bf16[2,8,1280], index: 0, kind: input, shape index: {}]
  %s1 = inlined_call_operand.vmem [shape: bf16[2,2,8,120], index: 1, kind: input, shape index: {}]
  %s2 = inlined_call_operand.vmem [shape: bf16[12,72], index: 2, kind: input, shape index: {}]
  %s3 = inlined_call_operand.vmem [shape: f32[12,1], index: 3, kind: input, shape index: {}]
  %s4 = inlined_call_operand.vmem [shape: f32[2,12,1280], index: 4, kind: output, shape index: {}]
  %s5 = sld [smem:[#allocation0]]
  $region68: #{convs_out.5} parent=0
    _
  %s7 = ssub.s32 1, %s5
  %s8 = scalar_select 0, %s7, %s5
  $region1: #{convs_out.5} parent=0
    #allocation3 [shape = 'u8[81920]{0}', space=vmem, size = 0x14000, scoped, tag = 'output window, operand 0']
    loop: start=0, step=1, limit=6
    $region2: #{convs_out.5} parent=1 // loop_pre_header
      _
    $region3: #{convs_out.5} parent=1 // loop_header
      %s10 = sphi 0, %s14
      %p11 = scmp.ge.s32.totalorder %s10, 6
      %s17 = sphi 0, %s29
      %s18 = sphi 0, %s25
      %s19 = sphi 0, %s17
      %s20 = sphi 0, %s18
      %s21 = sphi 0, %s19
      %s22 = sphi 0, %s20
      %s34 = sphi 0, %s36
      %s37 = sphi 0, %s34
      %s38 = sphi 0, %s37
      %s54 = sphi 0, %s38
      %s62 = sphi 0, %s64
      %s65 = sphi 0, %s62
      %s66 = sphi 0, %s65
      %s82 = sphi 0, %s66
      %s86 = sphi 0, %s86
      %s88 = sphi 0, %s86
      %s89 = sphi 0, %s88
      %s103 = sphi 0, %s89
      %s107 = sphi 0, %s107
      %s109 = sphi 0, %s107
      %s110 = sphi 0, %s109
      %s124 = sphi 0, %s110
      %s132 = sphi 0, %s134
      %s135 = sphi 0, %s132
      %s136 = sphi 0, %s135
      %s152 = sphi 0, %s136
    $region4: #{convs_out.5} parent=1 // loop_header_branch
      %13 = sbr.rel (%p11) target = $region8
    $region5: #{convs_out.5} parent=1 // loop_body
      %s15 = ssub.s32 %s10, 1
      %s16 = ssub.s32 %s10, 2
      %s23 = sadd.s32 1, %s18
      %p24 = scmp.ge.s32.totalorder %s23, 2
      %s25 = scalar_select %p24, 0, %s23
      %s26 = sadd.s32 1, %s17
      %s27 = scalar_select %p24, %s26, %s17
      %p28 = scmp.ge.s32.totalorder %s27, 2
      %s29 = scalar_select %p28, 0, %s27
      %s30 = ssub.s32 %s17, %s29
      %s31 = ssub.s32 %s18, %s25
      %s32 = sor.u32 %s30, %s31
      %p33 = scmp.eq.s32.totalorder %s32, 0
      %s35 = sadd.s32 %s34, 1
      %s36 = scalar_select %p33, %s34, %s35
      %p39 = pneg %p33
      %p40 = scmp.eq.s32.totalorder %s10, 3
      %p41 = por %p39, %p40
      %p42 = scmp.ne.s32.totalorder %s34, %s37
      %p43 = scmp.eq.s32.totalorder %s10, 0
      %p44 = por %p42, %p43
      %p45 = scmp.ne.s32.totalorder %s34, %s37
      %p46 = scmp.eq.s32.totalorder %s15, 3
      %p47 = por %p45, %p46
      %p48 = scmp.ne.s32.totalorder %s37, %s38
      %p49 = scmp.eq.s32.totalorder %s15, 0
      %p50 = por %p48, %p49
      %p51 = scmp.ne.s32.totalorder %s37, %s38
      %p52 = scmp.eq.s32.totalorder %s16, 3
      %p53 = por %p51, %p52
      %p55 = scmp.ne.s32.totalorder %s38, %s54
      %p56 = scmp.eq.s32.totalorder %s16, 0
      %p57 = por %p55, %p56
      %s58 = ssub.s32 %s17, %s29
      %s59 = ssub.s32 %s18, %s25
      %s60 = sor.u32 %s58, %s59
      %p61 = scmp.eq.s32.totalorder %s60, 0
      %s63 = sadd.s32 %s62, 1
      %s64 = scalar_select %p61, %s62, %s63
      %p67 = pneg %p61
      %p68 = scmp.eq.s32.totalorder %s10, 3
      %p69 = por %p67, %p68
      %p70 = scmp.ne.s32.totalorder %s62, %s65
      %p71 = scmp.eq.s32.totalorder %s10, 0
      %p72 = por %p70, %p71
      %p73 = scmp.ne.s32.totalorder %s62, %s65
      %p74 = scmp.eq.s32.totalorder %s15, 3
      %p75 = por %p73, %p74
      %p76 = scmp.ne.s32.totalorder %s65, %s66
      %p77 = scmp.eq.s32.totalorder %s15, 0
      %p78 = por %p76, %p77
      %p79 = scmp.ne.s32.totalorder %s65, %s66
      %p80 = scmp.eq.s32.totalorder %s16, 3
      %p81 = por %p79, %p80
      %p83 = scmp.ne.s32.totalorder %s66, %s82
      %p84 = scmp.eq.s32.totalorder %s16, 0
      %p85 = por %p83, %p84
      %s87 = sadd.s32 %s86, 1
      %p90 = scmp.eq.s32.totalorder %s10, 3
      %p91 = scmp.ne.s32.totalorder %s86, %s88
      %p92 = scmp.eq.s32.totalorder %s10, 0
      %p93 = por %p91, %p92
      %p94 = scmp.ne.s32.totalorder %s86, %s88
      %p95 = scmp.eq.s32.totalorder %s15, 3
      %p96 = por %p94, %p95
      %p97 = scmp.ne.s32.totalorder %s88, %s89
      %p98 = scmp.eq.s32.totalorder %s15, 0
      %p99 = por %p97, %p98
      %p100 = scmp.ne.s32.totalorder %s88, %s89
      %p101 = scmp.eq.s32.totalorder %s16, 3
      %p102 = por %p100, %p101
      %p104 = scmp.ne.s32.totalorder %s89, %s103
      %p105 = scmp.eq.s32.totalorder %s16, 0
      %p106 = por %p104, %p105
      %s108 = sadd.s32 %s107, 1
      %p111 = scmp.eq.s32.totalorder %s10, 3
      %p112 = scmp.ne.s32.totalorder %s107, %s109
      %p113 = scmp.eq.s32.totalorder %s10, 0
      %p114 = por %p112, %p113
      %p115 = scmp.ne.s32.totalorder %s107, %s109
      %p116 = scmp.eq.s32.totalorder %s15, 3
      %p117 = por %p115, %p116
      %p118 = scmp.ne.s32.totalorder %s109, %s110
      %p119 = scmp.eq.s32.totalorder %s15, 0
      %p120 = por %p118, %p119
      %p121 = scmp.ne.s32.totalorder %s109, %s110
      %p122 = scmp.eq.s32.totalorder %s16, 3
      %p123 = por %p121, %p122
      %p125 = scmp.ne.s32.totalorder %s110, %s124
      %p126 = scmp.eq.s32.totalorder %s16, 0
      %p127 = por %p125, %p126
      %s128 = ssub.s32 %s17, %s29
      %s129 = ssub.s32 %s18, %s25
      %s130 = sor.u32 %s128, %s129
      %p131 = scmp.eq.s32.totalorder %s130, 0
      %s133 = sadd.s32 %s132, 1
      %s134 = scalar_select %p131, %s132, %s133
      %p137 = pneg %p131
      %p138 = scmp.eq.s32.totalorder %s10, 3
      %p139 = por %p137, %p138
      %p140 = scmp.ne.s32.totalorder %s132, %s135
      %p141 = scmp.eq.s32.totalorder %s10, 0
      %p142 = por %p140, %p141
      %p143 = scmp.ne.s32.totalorder %s132, %s135
      %p144 = scmp.eq.s32.totalorder %s15, 3
      %p145 = por %p143, %p144
      %p146 = scmp.ne.s32.totalorder %s135, %s136
      %p147 = scmp.eq.s32.totalorder %s15, 0
      %p148 = por %p146, %p147
      %p149 = scmp.ne.s32.totalorder %s135, %s136
      %p150 = scmp.eq.s32.totalorder %s16, 3
      %p151 = por %p149, %p150
      %p153 = scmp.ne.s32.totalorder %s136, %s152
      %p154 = scmp.eq.s32.totalorder %s16, 0
      %p155 = por %p153, %p154
      %p156 = scmp.le.s32.totalorder 1, %s10
      %p157 = scmp.lt.s32.totalorder %s10, 5
      %p158 = pnand %p156, %p157
      %p159 = pneg %p158
      // Predicated region
      $region9: #{convs_out.5} parent=5 // pred_check
        _
      $region10: #{convs_out.5} parent=5 // pred_check_branch
        %161 = sbr.rel (%p158) target = $region12
      $region11: #{convs_out.5} parent=5 // pred_region
        %s162 = ssub.s32 %s10, 1
        // Predicated region
        $region13: #{convs_out.5} parent=11 // pred_check
          %p163 = pneg %p99
        $region14: #{convs_out.5} parent=11 // pred_check_branch
          %165 = sbr.rel (%p163) target = $region16
        $region15: #{convs_out.5} parent=11 // pred_region
          _
        $region16: #{convs_out.5} parent=11 // pred_fallthru
          _
        // Predicated region
        $region17: #{convs_out.5} parent=11 // pred_check
          %p166 = pneg %p120
        $region18: #{convs_out.5} parent=11 // pred_check_branch
          %168 = sbr.rel (%p166) target = $region20
        $region19: #{convs_out.5} parent=11 // pred_region
          _
        $region20: #{convs_out.5} parent=11 // pred_fallthru
          _
      $region12: #{convs_out.5} parent=5 // pred_fallthru
        _
      %p169 = scmp.lt.s32.totalorder %s10, 4
      // Predicated region
      $region21: #{convs_out.5} parent=5 // pred_check
        %p170 = pneg %p169
      $region22: #{convs_out.5} parent=5 // pred_check_branch
        %172 = sbr.rel (%p170) target = $region24
      $region23: #{convs_out.5} parent=5 // pred_region
        // Predicated region
        $region25: #{convs_out.5} parent=23 // pred_check
          %p173 = pneg %p44
        $region26: #{convs_out.5} parent=23 // pred_check_branch
          %175 = sbr.rel (%p173) target = $region28
        $region27: #{convs_out.5} parent=23 // pred_region
          %s176 = smul.u32 5, %s18
          %p177 = scmp.lt.s32.totalorder %s17, 1
          %s178 = scalar_select %p177, %s17, 1
          %p179 = scmp.lt.s32.totalorder %s176, 9
          %s180 = scalar_select %p179, %s176, 9
          %s181 = smul.addr %s178, 10
          %s182 = sadd.s32 %s180, %s181
          %s183 = smul.addr %s182, 4
          %s184 = scalar_lea.vmem %s0, %s183
          %s185 = smul.u32 5, %s18
        $region28: #{convs_out.5} parent=23 // pred_fallthru
          _
        // Predicated region
        $region29: #{convs_out.5} parent=23 // pred_check
          %p186 = pneg %p72
        $region30: #{convs_out.5} parent=23 // pred_check_branch
          %188 = sbr.rel (%p186) target = $region32
        $region31: #{convs_out.5} parent=23 // pred_region
          %p189 = scmp.lt.s32.totalorder %s17, 1
          %s190 = scalar_select %p189, %s17, 1
          %p191 = scmp.lt.s32.totalorder %s18, 1
          %s192 = scalar_select %p191, %s18, 1
          %s193 = smul.addr %s190, 2
          %s194 = sadd.s32 %s192, %s193
          %s195 = smul.addr %s194, 4
          %s196 = scalar_lea.vmem %s1, %s195
        $region32: #{convs_out.5} parent=23 // pred_fallthru
          _
      $region24: #{convs_out.5} parent=5 // pred_fallthru
        _
      %p197 = scmp.le.s32.totalorder 1, %s10
      %p198 = scmp.lt.s32.totalorder %s10, 5
      %p199 = pnand %p197, %p198
      %p200 = pneg %p199
      // Predicated region
      $region33: #{convs_out.5} parent=5 // pred_check
        _
      $region34: #{convs_out.5} parent=5 // pred_check_branch
        %202 = sbr.rel (%p199) target = $region36
      $region35: #{convs_out.5} parent=5 // pred_region
        %s203 = ssub.s32 %s10, 1
        %s204 = smul.u32 5, %s20
        %p205 = scmp.lt.s32.totalorder %s19, 1
        %s206 = scalar_select %p205, %s19, 1
        %p207 = scmp.lt.s32.totalorder %s204, 9
        %s208 = scalar_select %p207, %s204, 9
        %s209 = smul.addr %s206, 10
        %s210 = sadd.s32 %s208, %s209
        %s211 = smul.addr %s210, 4
        %s212 = scalar_lea.vmem %s0, %s211
        %p213 = pneg %p50
        %p214 = pneg %p47
        %p215 = scmp.lt.s32.totalorder %s19, 1
        %s216 = scalar_select %p215, %s19, 1
        %p217 = scmp.lt.s32.totalorder %s20, 1
        %s218 = scalar_select %p217, %s20, 1
        %s219 = smul.addr %s216, 2
        %s220 = sadd.s32 %s218, %s219
        %s221 = smul.addr %s220, 4
        %s222 = scalar_lea.vmem %s1, %s221
        %p223 = pneg %p78
        %p224 = pneg %p75
        %p225 = pneg %p99
        %p226 = pneg %p96
        %p227 = pneg %p120
        %p228 = pneg %p117
        %p229 = pneg %p148
        %p230 = pneg %p145
        %s231 = sand.u32 %s135, 1
        %s232 = sand.u32 %s135, 1
        %s233 = smul.addr %s232, 80
        %s234 = scalar_lea.vmem [#allocation3], %s233
        %s235 = smul.u32 5, %s20
        %p236 = scmp.lt.s32.totalorder %s19, 1
        %s237 = scalar_select %p236, %s19, 1
        %p238 = scmp.lt.s32.totalorder %s235, 9
        %s239 = scalar_select %p238, %s235, 9
        %s240 = smul.addr %s237, 10
        %s241 = sadd.s32 %s239, %s240
        %s242 = smul.addr %s241, 4
        %s243 = scalar_lea.vmem %s0, %s242
        %s244 = smul.u32 5, %s20
        %p245 = scmp.lt.s32.totalorder %s19, 1
        %s246 = scalar_select %p245, %s19, 1
        %p247 = scmp.lt.s32.totalorder %s20, 1
        %s248 = scalar_select %p247, %s20, 1
        %s249 = smul.addr %s246, 2
        %s250 = sadd.s32 %s248, %s249
        %s251 = smul.addr %s250, 4
        %s252 = scalar_lea.vmem %s1, %s251
        %s253 = smul.u32 5, %s20
        %v255 = vld [vmem:[%s243] sm:$0xff]
        %v256 = vld [vmem:[%s243 + $0x8] sm:$0xff]
        %v257 = vld [vmem:[%s243 + $0x10] sm:$0xf]
        %v258 = vld [vmem:[%s252] sm:$0xf]
        %v262 = vunpack.c.l.b16 %v255
        %v263 = vunpack.c.h.b16 %v255
        %v264 = vunpack.c.l.b16 %v256
        %v265 = vunpack.c.h.b16 %v256
        %v266 = vunpack.c.l.b16 %v257
        %v267 = vpack.c.b16 %v263, %v262
        %v268 = vpack.c.b16 %v265, %v264
        %v269 = vpack.c.b16 %v266, %v266
        %273 = vst [vmem:[#allocation2] sm:$0xff] %v267
        %274 = vst [vmem:[#allocation2 + $0x8] sm:$0xff] %v268
        %275 = vst [vmem:[#allocation2 + $0x10] sm:$0xf] %v269
        %v277 = vunpack.c.l.b16 %v258
        %v278 = vpack.c.b16 %v277, %v266
        %279 = vrot.lane.b32.xlu0 %v267, 127
        %v280 = vpop.permute.xlu0 %279
        %281 = vrot.lane.b32.xlu0 %v268, 127
        %v282 = vpop.permute.xlu0 %281
        %283 = vrot.lane.b32.xlu0 %v278, 127
        %v284 = vpop.permute.xlu0 %283
        %v285 = vrot.slane %v280, 4
        %v286 = vrot.slane %v282, 4
        %v287 = vrot.slane %v284, 4
        %vm288 = vcmask 1043456
        %v289 = vsel %vm288, %v285, %v286
        %vm290 = vcmask 1039360
        %v291 = vsel %vm290, %v280, %v289
        %v292 = vsel %vm288, %v286, %v287
        %v293 = vsel %vm290, %v282, %v292
        %v294 = vsel %vm290, %v284, %v287
        %298 = vst [vmem:[#allocation2 + $0x14] sm:$0xff] %v291
        %299 = vst [vmem:[#allocation2 + $0x1c] sm:$0xff] %v293
        %300 = vst [vmem:[#allocation2 + $0x24] sm:$0xf] %v294
        %301 = vrot.lane.b32.xlu0 %v267, 126
        %v302 = vpop.permute.xlu0 %301
        %303 = vrot.lane.b32.xlu0 %v268, 126
        %v304 = vpop.permute.xlu0 %303
        %305 = vrot.lane.b32.xlu0 %v278, 126
        %v306 = vpop.permute.xlu0 %305
        %v307 = vrot.slane %v302, 4
        %v308 = vrot.slane %v304, 4
        %v309 = vrot.slane %v306, 4
        %v310 = vsel %vm288, %v307, %v308
        %vm311 = vcmask 1031168
        %v312 = vsel %vm311, %v302, %v310
        %v313 = vsel %vm288, %v308, %v309
        %v314 = vsel %vm311, %v304, %v313
        %v315 = vsel %vm311, %v306, %v309
        %319 = vst [vmem:[#allocation2 + $0x28] sm:$0xff] %v312
        %320 = vst [vmem:[#allocation2 + $0x30] sm:$0xff] %v314
        %321 = vst [vmem:[#allocation2 + $0x38] sm:$0xf] %v315
        %322 = vrot.lane.b32.xlu0 %v267, 88
        %v323 = vpop.permute.xlu0 %322
        %324 = vrot.lane.b32.xlu0 %v268, 88
        %v325 = vpop.permute.xlu0 %324
        %326 = vrot.lane.b32.xlu0 %v278, 88
        %v327 = vpop.permute.xlu0 %326
        %v328 = vrot.slane %v323, 4
        %v329 = vrot.slane %v325, 4
        %v330 = vrot.slane %v327, 4
        %v331 = vsel %vm288, %v328, %v329
        %vm332 = vcmask 719872
        %v333 = vsel %vm332, %v323, %v331
        %v334 = vsel %vm288, %v329, %v330
        %v335 = vsel %vm332, %v325, %v334
        %v336 = vsel %vm332, %v327, %v330
        %340 = vst [vmem:[#allocation2 + $0x3c] sm:$0xff] %v333
        %341 = vst [vmem:[#allocation2 + $0x44] sm:$0xff] %v335
        %342 = vst [vmem:[#allocation2 + $0x4c] sm:$0xf] %v336
        %343 = vrot.lane.b32.xlu0 %v267, 87
        %v344 = vpop.permute.xlu0 %343
        %345 = vrot.lane.b32.xlu0 %v268, 87
        %v346 = vpop.permute.xlu0 %345
        %347 = vrot.lane.b32.xlu0 %v278, 87
        %v348 = vpop.permute.xlu0 %347
        %v349 = vrot.slane %v344, 4
        %v350 = vrot.slane %v346, 4
        %v351 = vrot.slane %v348, 4
        %v352 = vsel %vm288, %v349, %v350
        %vm353 = vcmask 711680
        %v354 = vsel %vm353, %v344, %v352
        %v355 = vsel %vm288, %v350, %v351
        %v356 = vsel %vm353, %v346, %v355
        %v357 = vsel %vm353, %v348, %v351
        %361 = vst [vmem:[#allocation2 + $0x50] sm:$0xff] %v354
        %362 = vst [vmem:[#allocation2 + $0x58] sm:$0xff] %v356
        %363 = vst [vmem:[#allocation2 + $0x60] sm:$0xf] %v357
        %364 = vrot.lane.b32.xlu0 %v267, 86
        %v365 = vpop.permute.xlu0 %364
        %366 = vrot.lane.b32.xlu0 %v268, 86
        %v367 = vpop.permute.xlu0 %366
        %368 = vrot.lane.b32.xlu0 %v278, 86
        %v369 = vpop.permute.xlu0 %368
        %v370 = vrot.slane %v365, 4
        %v371 = vrot.slane %v367, 4
        %v372 = vrot.slane %v369, 4
        %v373 = vsel %vm288, %v370, %v371
        %vm374 = vcmask 703488
        %v375 = vsel %vm374, %v365, %v373
        %v376 = vsel %vm288, %v371, %v372
        %v377 = vsel %vm374, %v367, %v376
        %v378 = vsel %vm374, %v369, %v372
        %382 = vst [vmem:[#allocation2 + $0x64] sm:$0xff] %v375
        %383 = vst [vmem:[#allocation2 + $0x6c] sm:$0xff] %v377
        %384 = vst [vmem:[#allocation2 + $0x74] sm:$0xf] %v378
        %385 = vrot.lane.b32.xlu0 %v267, 48
        %v386 = vpop.permute.xlu0 %385
        %387 = vrot.lane.b32.xlu0 %v268, 48
        %v388 = vpop.permute.xlu0 %387
        %389 = vrot.lane.b32.xlu0 %v278, 48
        %v390 = vpop.permute.xlu0 %389
        %v391 = vrot.slane %v386, 4
        %v392 = vrot.slane %v388, 4
        %v393 = vrot.slane %v390, 4
        %v394 = vsel %vm288, %v391, %v392
        %vm395 = vcmask 392192
        %v396 = vsel %vm395, %v386, %v394
        %v397 = vsel %vm288, %v392, %v393
        %v398 = vsel %vm395, %v388, %v397
        %v399 = vsel %vm395, %v390, %v393
        %403 = vst [vmem:[#allocation2 + $0x78] sm:$0xff] %v396
        %404 = vst [vmem:[#allocation2 + $0x80] sm:$0xff] %v398
        %405 = vst [vmem:[#allocation2 + $0x88] sm:$0xf] %v399
        %406 = vrot.lane.b32.xlu0 %v267, 47
        %v407 = vpop.permute.xlu0 %406
        %408 = vrot.lane.b32.xlu0 %v268, 47
        %v409 = vpop.permute.xlu0 %408
        %410 = vrot.lane.b32.xlu0 %v278, 47
        %v411 = vpop.permute.xlu0 %410
        %v412 = vrot.slane %v407, 4
        %v413 = vrot.slane %v409, 4
        %v414 = vrot.slane %v411, 4
        %v415 = vsel %vm288, %v412, %v413
        %vm416 = vcmask 384000
        %v417 = vsel %vm416, %v407, %v415
        %v418 = vsel %vm288, %v413, %v414
        %v419 = vsel %vm416, %v409, %v418
        %v420 = vsel %vm416, %v411, %v414
        %424 = vst [vmem:[#allocation2 + $0x8c] sm:$0xff] %v417
        %425 = vst [vmem:[#allocation2 + $0x94] sm:$0xff] %v419
        %426 = vst [vmem:[#allocation2 + $0x9c] sm:$0xf] %v420
        %427 = vrot.lane.b32.xlu0 %v267, 46
        %v428 = vpop.permute.xlu0 %427
        %429 = vrot.lane.b32.xlu0 %v268, 46
        %v430 = vpop.permute.xlu0 %429
        %431 = vrot.lane.b32.xlu0 %v278, 46
        %v432 = vpop.permute.xlu0 %431
        %v433 = vrot.slane %v428, 4
        %v434 = vrot.slane %v430, 4
        %v435 = vrot.slane %v432, 4
        %v436 = vsel %vm288, %v433, %v434
        %vm437 = vcmask 375808
        %v438 = vsel %vm437, %v428, %v436
        %v439 = vsel %vm288, %v434, %v435
        %v440 = vsel %vm437, %v430, %v439
        %v441 = vsel %vm437, %v432, %v435
        %445 = vst [vmem:[#allocation2 + $0xa0] sm:$0xff] %v438
        %446 = vst [vmem:[#allocation2 + $0xa8] sm:$0xff] %v440
        %447 = vst [vmem:[#allocation2 + $0xb0] sm:$0xf] %v441
        %v448 = vld [vmem:[%s2] sm:$0xf]
        %v449 = vld [vmem:[%s2 + $0x4] sm:$0x3]
        %v450 = vld [vmem:[#allocation2] sm:$0xff]
        %v451 = vld [vmem:[#allocation2 + $0x8] sm:$0xff]
        %v452 = vld [vmem:[#allocation2 + $0x10] sm:$0xf]
        %v453 = vld [vmem:[#allocation2 + $0x14] sm:$0xff]
        %v454 = vld [vmem:[#allocation2 + $0x1c] sm:$0xff]
        %v455 = vld [vmem:[#allocation2 + $0x24] sm:$0xf]
        %v456 = vld [vmem:[#allocation2 + $0x28] sm:$0xff]
        %v457 = vld [vmem:[#allocation2 + $0x30] sm:$0xff]
        %v458 = vld [vmem:[#allocation2 + $0x38] sm:$0xf]
        %v459 = vld [vmem:[#allocation2 + $0x3c] sm:$0xff]
        %v460 = vld [vmem:[#allocation2 + $0x44] sm:$0xff]
        %v461 = vld [vmem:[#allocation2 + $0x4c] sm:$0xf]
        %v462 = vld [vmem:[#allocation2 + $0x50] sm:$0xff]
        %v463 = vld [vmem:[#allocation2 + $0x58] sm:$0xff]
        %v464 = vld [vmem:[#allocation2 + $0x60] sm:$0xf]
        %v465 = vld [vmem:[#allocation2 + $0x64] sm:$0xff]
        %v466 = vld [vmem:[#allocation2 + $0x6c] sm:$0xff]
        %v467 = vld [vmem:[#allocation2 + $0x74] sm:$0xf]
        %v468 = vld [vmem:[#allocation2 + $0x78] sm:$0xff]
        %v469 = vld [vmem:[#allocation2 + $0x80] sm:$0xff]
        %v470 = vld [vmem:[#allocation2 + $0x88] sm:$0xf]
        %v471 = vld [vmem:[#allocation2 + $0x8c] sm:$0xff]
        %v472 = vld [vmem:[#allocation2 + $0x94] sm:$0xff]
        %v473 = vld [vmem:[#allocation2 + $0x9c] sm:$0xf]
        %v474 = vld [vmem:[#allocation2 + $0xa0] sm:$0xff]
        %v475 = vld [vmem:[#allocation2 + $0xa8] sm:$0xff]
        %v476 = vld [vmem:[#allocation2 + $0xb0] sm:$0xf]
        %v477 = vld [vmem:[%s3] sm:$0xff]
        %v478 = vld [vmem:[%s3 + $0x8] sm:$0xf]
        %480 = vset.pattern.permute.xlu0 0
        %481 = vperm.xlu0 %480, %v477
        %v482 = vpop.permute.xlu0 %481
        %485 = vset.pattern.permute.xlu0 0
        %486 = vperm.xlu0 %485, %v478
        %v487 = vpop.permute.xlu0 %486
        %v491 = vunpack.c.l.b16 %v448
        %v492 = vunpack.c.l.b16 %v449
        %v493 = vpack.c.b16 %v492, %v491
        %v521 = vunpack.c.l.b16 %v450
        %v522 = vunpack.c.h.b16 %v450
        %v523 = vunpack.c.l.b16 %v451
        %v524 = vunpack.c.h.b16 %v451
        %v525 = vunpack.c.l.b16 %v452
        %v526 = vunpack.c.l.b16 %v453
        %v527 = vunpack.c.h.b16 %v453
        %v528 = vunpack.c.l.b16 %v454
        %v529 = vunpack.c.h.b16 %v454
        %v530 = vunpack.c.l.b16 %v455
        %v531 = vunpack.c.l.b16 %v456
        %v532 = vunpack.c.h.b16 %v456
        %v533 = vunpack.c.l.b16 %v457
        %v534 = vunpack.c.h.b16 %v457
        %v535 = vunpack.c.l.b16 %v458
        %v536 = vunpack.c.l.b16 %v459
        %v537 = vunpack.c.h.b16 %v459
        %v538 = vunpack.c.l.b16 %v460
        %v539 = vunpack.c.h.b16 %v460
        %v540 = vunpack.c.l.b16 %v461
        %v541 = vunpack.c.l.b16 %v462
        %v542 = vunpack.c.h.b16 %v462
        %v543 = vunpack.c.l.b16 %v463
        %v544 = vunpack.c.h.b16 %v463
        %v545 = vunpack.c.l.b16 %v464
        %v546 = vunpack.c.l.b16 %v465
        %v547 = vunpack.c.h.b16 %v465
        %v548 = vunpack.c.l.b16 %v466
        %v549 = vunpack.c.h.b16 %v466
        %v550 = vunpack.c.l.b16 %v467
        %v551 = vunpack.c.l.b16 %v468
        %v552 = vunpack.c.h.b16 %v468
        %v553 = vunpack.c.l.b16 %v469
        %v554 = vunpack.c.h.b16 %v469
        %v555 = vunpack.c.l.b16 %v470
        %v556 = vunpack.c.l.b16 %v471
        %v557 = vunpack.c.h.b16 %v471
        %v558 = vunpack.c.l.b16 %v472
        %v559 = vunpack.c.h.b16 %v472
        %v560 = vunpack.c.l.b16 %v473
        %v561 = vunpack.c.l.b16 %v474
        %v562 = vunpack.c.h.b16 %v474
        %v563 = vunpack.c.l.b16 %v475
        %v564 = vunpack.c.h.b16 %v475
        %v565 = vunpack.c.l.b16 %v476
        %v566 = vpack.c.b16 %v526, %v521
        %v567 = vpack.c.b16 %v527, %v522
        %v568 = vpack.c.b16 %v528, %v523
        %v569 = vpack.c.b16 %v529, %v524
        %v570 = vpack.c.b16 %v530, %v525
        %v571 = vpack.c.b16 %v536, %v531
        %v572 = vpack.c.b16 %v537, %v532
        %v573 = vpack.c.b16 %v538, %v533
        %v574 = vpack.c.b16 %v539, %v534
        %v575 = vpack.c.b16 %v540, %v535
        %v576 = vpack.c.b16 %v546, %v541
        %v577 = vpack.c.b16 %v547, %v542
        %v578 = vpack.c.b16 %v548, %v543
        %v579 = vpack.c.b16 %v549, %v544
        %v580 = vpack.c.b16 %v550, %v545
        %v581 = vpack.c.b16 %v556, %v551
        %v582 = vpack.c.b16 %v557, %v552
        %v583 = vpack.c.b16 %v558, %v553
        %v584 = vpack.c.b16 %v559, %v554
        %v585 = vpack.c.b16 %v560, %v555
        %v586 = vpack.c.b16 %v561, %v561
        %v587 = vpack.c.b16 %v562, %v562
        %v588 = vpack.c.b16 %v563, %v563
        %v589 = vpack.c.b16 %v564, %v564
        %v590 = vpack.c.b16 %v565, %v565
        %vm611 = vcmask 588800
        %v613 = vsel %vm611, %v493, 0
        %vm615 = vcmask 1043456
        %v617 = vsel %vm615, %v586, 0
        %v620 = vsel %vm615, %v587, 0
        %v623 = vsel %vm615, %v588, 0
        %v626 = vsel %vm615, %v589, 0
        %v629 = vsel %vm615, %v590, 0
        %631 = vmatprep.subr.bf16.mxu0 %v567
        %632 = vmatpush1.bf16.msra.mxu0 %v566
        %633 = vmatprep.subr.bf16.mxu0 %v572
        %634 = vmatpush1.bf16.msra.mxu0 %v571
        %635 = vmatprep.subr.bf16.mxu0 %v577
        %636 = vmatpush1.bf16.msra.mxu0 %v576
        %637 = vmatprep.subr.bf16.mxu0 %v582
        %638 = vmatpush1.bf16.msra.mxu0 %v581
        %639 = vmatprep.subr.bf16.mxu0 %v620
        %640 = vmatpush1.bf16.msra.mxu0 %v617
        %641 = vmatprep.subr.bf16.mxu0 0
        %642 = vmatpush1.bf16.msra.mxu0 0
        %643 = vmatprep.subr.bf16.mxu0 0
        %644 = vmatpush1.bf16.msra.mxu0 0
        %645 = vmatprep.subr.bf16.mxu0 0
        %646 = vmatpush1.bf16.msra.mxu0 0
        %647 = vmatprep.subr.bf16.mxu0 0
        %648 = vmatpush1.bf16.msra.mxu0 0
        %649 = vmatprep.subr.bf16.mxu0 0
        %650 = vmatpush1.bf16.msra.mxu0 0
        %651 = vmatprep.subr.bf16.mxu0 0
        %652 = vmatpush1.bf16.msra.mxu0 0
        %653 = vmatprep.subr.bf16.mxu0 0
        %654 = vmatpush1.bf16.msra.mxu0 0
        %655 = vmatprep.subr.bf16.mxu0 0
        %656 = vmatpush1.bf16.msra.mxu0 0
        %657 = vmatprep.subr.bf16.mxu0 0
        %658 = vmatpush1.bf16.msra.mxu0 0
        %659 = vmatprep.subr.bf16.mxu0 0
        %660 = vmatpush1.bf16.msra.mxu0 0
        %661 = vmatprep.subr.bf16.mxu0 0
        %662 = vmatpush1.bf16.msra.mxu0 0
        %663 = vmatprep.mubr.bf16.mxu0 0
        %664 = vmatmul.mubr.bf16.gmra.mrb[0].mxu0 %v613
        %v665 = vpop.f32.mrb[0].mxu0
        %v666 = vadd.f32 %v482, %v665
        %v667 = vpop.f32.mrb[0].mxu0
        %v668 = vadd.f32 %v482, %v667
        %v669 = vpop.f32.mrb[0].mxu0
        %v670 = vadd.f32 %v487, %v669
        %v671 = vpop.f32.mrb[0].mxu0
        %v672 = vadd.f32 %v487, %v671
        %673 = vdwg.mxu0
        %674 = vmatprep.subr.bf16.mxu0 %v569
        %675 = vmatpush1.bf16.msra.mxu0 %v568
        %676 = vmatprep.subr.bf16.mxu0 %v574
        %677 = vmatpush1.bf16.msra.mxu0 %v573
        %678 = vmatprep.subr.bf16.mxu0 %v579
        %679 = vmatpush1.bf16.msra.mxu0 %v578
        %680 = vmatprep.subr.bf16.mxu0 %v584
        %681 = vmatpush1.bf16.msra.mxu0 %v583
        %682 = vmatprep.subr.bf16.mxu0 %v626
        %683 = vmatpush1.bf16.msra.mxu0 %v623
        %684 = vmatprep.subr.bf16.mxu0 0
        %685 = vmatpush1.bf16.msra.mxu0 0
        %686 = vmatprep.subr.bf16.mxu0 0
        %687 = vmatpush1.bf16.msra.mxu0 0
        %688 = vmatprep.subr.bf16.mxu0 0
        %689 = vmatpush1.bf16.msra.mxu0 0
        %690 = vmatprep.subr.bf16.mxu0 0
        %691 = vmatpush1.bf16.msra.mxu0 0
        %692 = vmatprep.subr.bf16.mxu0 0
        %693 = vmatpush1.bf16.msra.mxu0 0
        %694 = vmatprep.subr.bf16.mxu0 0
        %695 = vmatpush1.bf16.msra.mxu0 0
        %696 = vmatprep.subr.bf16.mxu0 0
        %697 = vmatpush1.bf16.msra.mxu0 0
        %698 = vmatprep.subr.bf16.mxu0 0
        %699 = vmatpush1.bf16.msra.mxu0 0
        %700 = vmatprep.subr.bf16.mxu0 0
        %701 = vmatpush1.bf16.msra.mxu0 0
        %702 = vmatprep.subr.bf16.mxu0 0
        %703 = vmatpush1.bf16.msra.mxu0 0
        %704 = vmatprep.subr.bf16.mxu0 0
        %705 = vmatpush1.bf16.msra.mxu0 0
        %706 = vmatprep.mubr.bf16.mxu0 0
        %707 = vmatmul.mubr.bf16.gmra.mrb[0].mxu0 %v613
        %v708 = vpop.f32.mrb[0].mxu0
        %v709 = vadd.f32 %v482, %v708
        %v710 = vpop.f32.mrb[0].mxu0
        %v711 = vadd.f32 %v482, %v710
        %v712 = vpop.f32.mrb[0].mxu0
        %v713 = vadd.f32 %v487, %v712
        %v714 = vpop.f32.mrb[0].mxu0
        %v715 = vadd.f32 %v487, %v714
        %716 = vdwg.mxu0
        %717 = vmatprep.subr.bf16.mxu0 0
        %718 = vmatpush1.bf16.msra.mxu0 %v570
        %719 = vmatprep.subr.bf16.mxu0 0
        %720 = vmatpush1.bf16.msra.mxu0 %v575
        %721 = vmatprep.subr.bf16.mxu0 0
        %722 = vmatpush1.bf16.msra.mxu0 %v580
        %723 = vmatprep.subr.bf16.mxu0 0
        %724 = vmatpush1.bf16.msra.mxu0 %v585
        %725 = vmatprep.subr.bf16.mxu0 0
        %726 = vmatpush1.bf16.msra.mxu0 %v629
        %727 = vmatprep.subr.bf16.mxu0 0
        %728 = vmatpush1.bf16.msra.mxu0 0
        %729 = vmatprep.subr.bf16.mxu0 0
        %730 = vmatpush1.bf16.msra.mxu0 0
        %731 = vmatprep.subr.bf16.mxu0 0
        %732 = vmatpush1.bf16.msra.mxu0 0
        %733 = vmatprep.subr.bf16.mxu0 0
        %734 = vmatpush1.bf16.msra.mxu0 0
        %735 = vmatprep.subr.bf16.mxu0 0
        %736 = vmatpush1.bf16.msra.mxu0 0
        %737 = vmatprep.subr.bf16.mxu0 0
        %738 = vmatpush1.bf16.msra.mxu0 0
        %739 = vmatprep.subr.bf16.mxu0 0
        %740 = vmatpush1.bf16.msra.mxu0 0
        %741 = vmatprep.subr.bf16.mxu0 0
        %742 = vmatpush1.bf16.msra.mxu0 0
        %743 = vmatprep.subr.bf16.mxu0 0
        %744 = vmatpush1.bf16.msra.mxu0 0
        %745 = vmatprep.subr.bf16.mxu0 0
        %746 = vmatpush1.bf16.msra.mxu0 0
        %747 = vmatprep.subr.bf16.mxu0 0
        %748 = vmatpush1.bf16.msra.mxu0 0
        %749 = vmatprep.mubr.bf16.mxu0 0
        %750 = vmatmul.mubr.bf16.gmra.mrb[0].mxu0 %v613
        %v751 = vpop.f32.mrb[0].mxu0
        %v752 = vadd.f32 %v482, %v751
        %v753 = vpop.f32.mrb[0].mxu0
        %v754 = vpop.f32.mrb[0].mxu0
        %v755 = vadd.f32 %v487, %v754
        %v756 = vpop.f32.mrb[0].mxu0
        %757 = vdwg.mxu0
        %v758 = vmul.f32 %v666, 0.5
        %v759 = vmul.f32 %v668, 0.5
        %v760 = vmul.f32 %v709, 0.5
        %v761 = vmul.f32 %v711, 0.5
        %v762 = vmul.f32 %v752, 0.5
        %v763 = vmul.f32 %v670, 0.5
        %v764 = vmul.f32 %v672, 0.5
        %v765 = vmul.f32 %v713, 0.5
        %v766 = vmul.f32 %v715, 0.5
        %v767 = vmul.f32 %v755, 0.5
        %v768 = vmul.f32 %v666, %v666
        %v769 = vmul.f32 %v668, %v668
        %v770 = vmul.f32 %v709, %v709
        %v771 = vmul.f32 %v711, %v711
        %v772 = vmul.f32 %v752, %v752
        %v773 = vmul.f32 %v670, %v670
        %v774 = vmul.f32 %v672, %v672
        %v775 = vmul.f32 %v713, %v713
        %v776 = vmul.f32 %v715, %v715
        %v777 = vmul.f32 %v755, %v755
        %v778 = vmul.f32 %v768, %v666
        %v779 = vmul.f32 %v769, %v668
        %v780 = vmul.f32 %v770, %v709
        %v781 = vmul.f32 %v771, %v711
        %v782 = vmul.f32 %v772, %v752
        %v783 = vmul.f32 %v773, %v670
        %v784 = vmul.f32 %v774, %v672
        %v785 = vmul.f32 %v775, %v713
        %v786 = vmul.f32 %v776, %v715
        %v787 = vmul.f32 %v777, %v755
        %v788 = vmul.f32 %v778, 0.044715
        %v789 = vmul.f32 %v779, 0.044715
        %v790 = vmul.f32 %v780, 0.044715
        %v791 = vmul.f32 %v781, 0.044715
        %v792 = vmul.f32 %v782, 0.044715
        %v793 = vmul.f32 %v783, 0.044715
        %v794 = vmul.f32 %v784, 0.044715
        %v795 = vmul.f32 %v785, 0.044715
        %v796 = vmul.f32 %v786, 0.044715
        %v797 = vmul.f32 %v787, 0.044715
        %v798 = vadd.f32 %v666, %v788
        %v799 = vadd.f32 %v668, %v789
        %v800 = vadd.f32 %v709, %v790
        %v801 = vadd.f32 %v711, %v791
        %v802 = vadd.f32 %v752, %v792
        %v803 = vadd.f32 %v670, %v793
        %v804 = vadd.f32 %v672, %v794
        %v805 = vadd.f32 %v713, %v795
        %v806 = vadd.f32 %v715, %v796
        %v807 = vadd.f32 %v755, %v797
        %v808 = vmul.f32 %v798, 0.7978846
        %v809 = vmul.f32 %v799, 0.7978846
        %v810 = vmul.f32 %v800, 0.7978846
        %v811 = vmul.f32 %v801, 0.7978846
        %v812 = vmul.f32 %v802, 0.7978846
        %v813 = vmul.f32 %v803, 0.7978846
        %v814 = vmul.f32 %v804, 0.7978846
        %v815 = vmul.f32 %v805, 0.7978846
        %v816 = vmul.f32 %v806, 0.7978846
        %v817 = vmul.f32 %v807, 0.7978846
        %v818 = vtanh.pop %v808
        %v819 = vtanh.pop %v809
        %v820 = vtanh.pop %v810
        %v821 = vtanh.pop %v811
        %v822 = vtanh.pop %v812
        %v823 = vtanh.pop %v813
        %v824 = vtanh.pop %v814
        %v825 = vtanh.pop %v815
        %v826 = vtanh.pop %v816
        %v827 = vtanh.pop %v817
        %v828 = vadd.f32 %v818, 1.0
        %v829 = vadd.f32 %v819, 1.0
        %v830 = vadd.f32 %v820, 1.0
        %v831 = vadd.f32 %v821, 1.0
        %v832 = vadd.f32 %v822, 1.0
        %v833 = vadd.f32 %v823, 1.0
        %v834 = vadd.f32 %v824, 1.0
        %v835 = vadd.f32 %v825, 1.0
        %v836 = vadd.f32 %v826, 1.0
        %v837 = vadd.f32 %v827, 1.0
        %v838 = vmul.f32 %v758, %v828
        %v839 = vmul.f32 %v759, %v829
        %v840 = vmul.f32 %v760, %v830
        %v841 = vmul.f32 %v761, %v831
        %v842 = vmul.f32 %v762, %v832
        %v843 = vmul.f32 %v763, %v833
        %v844 = vmul.f32 %v764, %v834
        %v845 = vmul.f32 %v765, %v835
        %v846 = vmul.f32 %v766, %v836
        %v847 = vmul.f32 %v767, %v837
        %848 = vst [vmem:[%s234] sm:$0xff] %v838
        %849 = vst [vmem:[%s234 + $0x8] sm:$0xff] %v839
        %850 = vst [vmem:[%s234 + $0x10] sm:$0xff] %v840
        %851 = vst [vmem:[%s234 + $0x18] sm:$0xff] %v841
        %852 = vst [vmem:[%s234 + $0x20] sm:$0xff] %v842
        %853 = vst [vmem:[%s234 + $0x28] sm:$0xf] %v843
        %854 = vst [vmem:[%s234 + $0x30] sm:$0xf] %v844
        %855 = vst [vmem:[%s234 + $0x38] sm:$0xf] %v845
        %856 = vst [vmem:[%s234 + $0x40] sm:$0xf] %v846
        %857 = vst [vmem:[%s234 + $0x48] sm:$0xf] %v847
        %s858 = sand.u32 %s135, 1
        %s859 = sand.u32 %s135, 1
        %s860 = smul.addr %s859, 80
        %s861 = scalar_lea.vmem [#allocation3], %s860
        // Predicated region
        $region37: #{convs_out.5} parent=35 // pred_check
          %p862 = pneg %p145
        $region38: #{convs_out.5} parent=35 // pred_check_branch
          %864 = sbr.rel (%p862) target = $region40
        $region39: #{convs_out.5} parent=35 // pred_region
          %s865 = smul.u32 5, %s20
          %s866 = smul.addr %s19, 20
          %s867 = sadd.s32 %s865, %s866
          %s868 = smul.addr %s867, 8
          %s869 = scalar_lea.vmem %s4, %s868
          // Predicated region
          $region41: #{convs_out.5} parent=39 // pred_check
            _
          $region42: #{convs_out.5} parent=39 // pred_check_branch
            %871 = sbr.rel (0) target = $region44
          $region43: #{convs_out.5} parent=39 // pred_region
            // Predicated region
            $region45: #{convs_out.5} parent=43 // pred_check
              _
            $region46: #{convs_out.5} parent=43 // pred_check_branch
              %873 = sbr.rel (0) target = $region48
            $region47: #{convs_out.5} parent=43 // pred_region
              loop: start=0, step=1, limit=1
              $region49: #{convs_out.5} parent=47 // loop_pre_header
                _
              $region50: #{convs_out.5} parent=47 // loop_header
                %s875 = sphi 0, %s879
                %p876 = scmp.ge.s32.totalorder %s875, 1
                %s880 = sphi %s861, %s861
                %s881 = sphi %s869, %s869
              $region51: #{convs_out.5} parent=47 // loop_header_branch
                %878 = sbr.rel (%p876) target = $region55
              $region52: #{convs_out.5} parent=47 // loop_body
                %v882 = vld [vmem:[%s880] sm:$0xff]
                %883 = vst [vmem:[%s881] sm:$0xff] %v882
                %v884 = vld [vmem:[%s880 + $0x8] sm:$0xff]
                %885 = vst [vmem:[%s881 + $0x8] sm:$0xff] %v884
                %v886 = vld [vmem:[%s880 + $0x10] sm:$0xff]
                %887 = vst [vmem:[%s881 + $0x10] sm:$0xff] %v886
                %v888 = vld [vmem:[%s880 + $0x18] sm:$0xff]
                %889 = vst [vmem:[%s881 + $0x18] sm:$0xff] %v888
                %v890 = vld [vmem:[%s880 + $0x20] sm:$0xff]
                %891 = vst [vmem:[%s881 + $0x20] sm:$0xff] %v890
                %v892 = vld [vmem:[%s880 + $0x28] sm:$0xff]
                %893 = vst [vmem:[%s881 + $0x50] sm:$0xff] %v892
                %v894 = vld [vmem:[%s880 + $0x30] sm:$0xff]
                %895 = vst [vmem:[%s881 + $0x58] sm:$0xff] %v894
                %v896 = vld [vmem:[%s880 + $0x38] sm:$0xff]
                %897 = vst [vmem:[%s881 + $0x60] sm:$0xff] %v896
                %v898 = vld [vmem:[%s880 + $0x40] sm:$0xff]
                %899 = vst [vmem:[%s881 + $0x68] sm:$0xff] %v898
                %v900 = vld [vmem:[%s880 + $0x48] sm:$0xff]
                %901 = vst [vmem:[%s881 + $0x70] sm:$0xff] %v900
              $region53: #{convs_out.5} parent=47 // loop_footer
                %s879 = sadd.s32 1, %s875
              $region54: #{convs_out.5} parent=47 // loop_footer_branch
                %874 = sbr.rel target = $region50
              $region55: #{convs_out.5} parent=47 // loop_exit
                _
            $region48: #{convs_out.5} parent=43 // pred_fallthru
              _
            // Predicated region
            $region56: #{convs_out.5} parent=43 // pred_check
              _
            $region57: #{convs_out.5} parent=43 // pred_check_branch
              %903 = sbr.rel target = $region59
            $region58: #{convs_out.5} parent=43 // pred_region
              _
            $region59: #{convs_out.5} parent=43 // pred_fallthru
              _
          $region44: #{convs_out.5} parent=39 // pred_fallthru
            _
          %904 = vnop
        $region40: #{convs_out.5} parent=35 // pred_fallthru
          _
      $region36: #{convs_out.5} parent=5 // pred_fallthru
        _
      %p905 = scmp.le.s32.totalorder 2, %s10
      // Predicated region
      $region60: #{convs_out.5} parent=5 // pred_check
        %p906 = pneg %p905
      $region61: #{convs_out.5} parent=5 // pred_check_branch
        %908 = sbr.rel (%p906) target = $region63
      $region62: #{convs_out.5} parent=5 // pred_region
        %s909 = ssub.s32 %s10, 2
        // Predicated region
        $region64: #{convs_out.5} parent=62 // pred_check
          %p910 = pneg %p151
        $region65: #{convs_out.5} parent=62 // pred_check_branch
          %912 = sbr.rel (%p910) target = $region67
        $region66: #{convs_out.5} parent=62 // pred_region
          %s913 = sand.u32 %s136, 1
          %s914 = sand.u32 %s136, 1
          %s915 = smul.addr %s914, 80
          %s916 = scalar_lea.vmem [#allocation3], %s915
        $region67: #{convs_out.5} parent=62 // pred_fallthru
          _
      $region63: #{convs_out.5} parent=5 // pred_fallthru
        _
    $region6: #{convs_out.5} parent=1 // loop_footer
      %s14 = sadd.s32 1, %s10
    $region7: #{convs_out.5} parent=1 // loop_footer_branch
      %9 = sbr.rel target = $region3
    $region8: #{convs_out.5} parent=1 // loop_exit
      _

</llo_original>
